<compile_context>
chip_gen: v7x
topology: tpu7x:2x2x1
jax: 0.10.0
libtpu: 0.0.40
codegen_flags: <defaults>
</compile_context>

<pallas_src>
import jax
import jax.numpy as jnp
from jax import lax
from jax.experimental import pallas as pl
from jax.experimental.pallas import tpu as pltpu


def _device_kind():
    try:
        return jax.devices()[0].device_kind.lower()
    except Exception:
        return ""


def _num_tensorcores():
    k = _device_kind()
    return 2 if ("v7" in k or "7x" in k) else 1


def _vmem_budget_bytes():
    k = _device_kind()
    if "v7" in k or "7x" in k:
        return 48 * 1024 * 1024   # v7x: 64 MiB physical per TC -> stay well under
    if "v5" in k or "v6" in k:
        return 64 * 1024 * 1024   # v5e/v6e: 128 MiB physical
    return None                   # unknown chip -> keep compiler default


def _const_spec(shape, single_buffer):
    """BlockSpec for grid-invariant (weight) inputs; single-buffered if possible."""
    idx_map = lambda b: (0,) * len(shape)
    if single_buffer:
        try:
            return pl.BlockSpec(shape, idx_map, pipeline_mode=pl.Buffered(1))
        except Exception:
            pass
    return pl.BlockSpec(shape, idx_map)


def make_cross_attention(B, N, C, num_heads=8, qk_scale=None,
                         compute_dtype=jnp.bfloat16, grid_steps=None):
    head_dim = C // num_heads
    scale = qk_scale if qk_scale is not None else head_dim ** (-0.5)

    ceil_div = lambda a, b: -(-a // b)
    N_pad = ceil_div(N, 8) * 8                     # sublane-aligned token count

    # ---- VMEM budget -> max batch tile -------------------------------------
    itemsize = jnp.dtype(compute_dtype).itemsize
    budget = _vmem_budget_bytes()
    usable = budget if budget is not None else 32 * 1024 * 1024
    # invariant weights (worst case: double-buffered if Buffered(1) is rejected)
    weight_bytes = (C * C + C * 2 * C + C * C + num_heads * C) * itemsize * 2 + C * 4 * 2
    # per batch element: double-buffered x tile + in-kernel intermediates
    # (kv f32, k/v compute-dtype copies, scores/attn f32, ctx f32, ...)
    per_elem = N_pad * C * (2 * itemsize + 16) + C * (2 * itemsize + 24)
    avail = usable - weight_bytes - (2 << 20)      # 2 MiB headroom
    Bt_max = max(1, avail // per_elem)

    # ---- grid sizing ---------------------------------------------------------
    num_cores = _num_tensorcores()
    if grid_steps is not None:
        steps = int(grid_steps)
    elif num_cores > 1:
        # v7x: feed both TensorCores via the "parallel" grid axis; steps stays a
        # multiple of the core count.  (Bt*N near a multiple of 256 is a soft
        # preference for the 256-wide MXU.)
        steps = max(num_cores, ceil_div(B, Bt_max))
        steps = ceil_div(steps, num_cores) * num_cores
        steps = min(steps, max(B, 1))
    else:
        # v5e/v6e: single TC -> fewest, largest steps that fit VMEM.
        steps = ceil_div(B, Bt_max)
    steps = max(1, steps)
    Bt = ceil_div(B, steps)
    B_pad = steps * Bt

    # ---- kernel --------------------------------------------------------------
    def kernel(x0_ref, x_ref, wq_ref, wkv_ref, wp_ref, bp_ref, segT_ref, o_ref):
        f32 = jnp.float32
        cdt = x_ref.dtype

        x0 = x0_ref[0]                 # (Bt, C)      token-0 rows only
        xt = x_ref[...]                # (Bt, Np, C)
        segT = segT_ref[...]           # (H, C)       exact 0/1 head selector

        # q projection: only Bt rows (no wasted MXU work on non-query tokens).
        q = jnp.dot(x0, wq_ref[...], preferred_element_type=f32)          # (Bt, C) f32

        # Fused k|v projection over all tokens.  Np is a multiple of 8, so the
        # (Bt, Np, C) -> (Bt*Np, C) collapse is sublane-tile aligned.
        kv = jnp.dot(xt.reshape(Bt * N_pad, C), wkv_ref[...],
                     preferred_element_type=f32)                          # (Bt*Np, 2C) f32
        k = kv[:, :C].astype(cdt).reshape(Bt, N_pad, C)
        v = kv[:, C:].astype(cdt).reshape(Bt, N_pad, C)

        # Per-head query via exact 0/1 mask (segT), tokens on the lane axis.
        qh = q.astype(cdt)[:, None, :] * segT[None, :, :]                 # (Bt, H, C)
        s = jnp.einsum('bhc,bnc->bhn', qh, k,
                       preferred_element_type=f32) * scale                # (Bt, H, Np) f32
        if N_pad != N:
            tok = lax.broadcasted_iota(jnp.int32, s.shape, 2)
            s = jnp.where(tok < N, s, jnp.float32(-1e30))                 # mask pad tokens

        # Softmax over tokens (lane-dense), all in f32.
        m = jnp.max(s, axis=-1, keepdims=True)
        e = jnp.exp(s - m)
        attn = e / jnp.sum(e, axis=-1, keepdims=True)                     # (Bt, H, Np) f32

        # Per-head context, then fold heads back onto channels with segT.
        ctx = jnp.einsum('bhn,bnc->bhc', attn.astype(cdt), v,
                         preferred_element_type=f32)                      # (Bt, H, C) f32
        out = jnp.sum(ctx * segT.astype(f32)[None, :, :], axis=1)         # (Bt, C) f32

        # Output projection (pre-transposed weight) + bias; lane-dense store.
        y = jnp.dot(out.astype(cdt), wp_ref[...],
                    preferred_element_type=f32) + bp_ref[...]
        o_ref[0] = y.astype(o_ref.dtype)

    # ---- pallas_call builders ------------------------------------------------
    def _build(single_buffer):
        in_specs = [
            pl.BlockSpec((1, Bt, C), lambda b: (b, 0, 0)),         # token-0 rows tile
            pl.BlockSpec((Bt, N_pad, C), lambda b: (b, 0, 0)),     # full-token batch tile
            _const_spec((C, C), single_buffer),                    # Wq^T
            _const_spec((C, 2 * C), single_buffer),                # [Wk|Wv]^T
            _const_spec((C, C), single_buffer),                    # Wp^T
            _const_spec((1, C), single_buffer),                    # proj bias (f32)
            _const_spec((num_heads, C), single_buffer),            # segT
        ]
        cp_kwargs = dict(dimension_semantics=("parallel",))
        if budget is not None:
            cp_kwargs["vmem_limit_bytes"] = int(budget)
        return pl.pallas_call(
            kernel,
            out_shape=jax.ShapeDtypeStruct((steps, Bt, C), jnp.float32),
            grid_spec=pltpu.PrefetchScalarGridSpec(
                num_scalar_prefetch=0,
                grid=(steps,),
                in_specs=in_specs,
                out_specs=pl.BlockSpec((1, Bt, C), lambda b: (b, 0, 0)),
            ),
            compiler_params=pltpu.CompilerParams(**cp_kwargs),
        )

    call_single = _build(True)
    call_double = _build(False)

    # ---- host wrapper ----------------------------------------------------------
    def forward(x, wq, wk, wv, wp, bp):
        cdt = compute_dtype
        # One-time host-side layout plumbing (pre-transposed / fused weights).
        wq_t = wq.T.astype(cdt)                                        # (C, C)
        wkv_t = jnp.concatenate([wk.T, wv.T], axis=1).astype(cdt)      # (C, 2C)
        wp_t = wp.T.astype(cdt)                                        # (C, C)
        bp2 = bp.reshape(1, C).astype(jnp.float32)                     # (1, C)
        h_idx = lax.broadcasted_iota(jnp.int32, (num_heads, C), 0)
        c_idx = lax.broadcasted_iota(jnp.int32, (num_heads, C), 1)
        segT = (c_idx // head_dim == h_idx).astype(cdt)                # (H, C) exact 0/1

        x0 = x[:, 0, :]                                                # token-0 gather
        xt = x
        if B_pad != B:
            x0 = jnp.pad(x0, ((0, B_pad - B), (0, 0)))
            xt = jnp.pad(xt, ((0, B_pad - B), (0, 0), (0, 0)))
        if N_pad != N:
            xt = jnp.pad(xt, ((0, 0), (0, N_pad - N), (0, 0)))
        x0 = x0.reshape(steps, Bt, C).astype(cdt)
        xt = xt.astype(cdt)

        args = (x0, xt, wq_t, wkv_t, wp_t, bp2, segT)
        try:
            out = call_single(*args)      # single-buffered invariant weights
        except Exception:
            out = call_double(*args)      # fallback: default double-buffering
        return out.reshape(B_pad, 1, C)[:B].astype(x.dtype)

    return forward, scale, head_dim


def reference_cross_attention(x, wq, wk, wv, wp, bp, num_heads, scale):
    # Pure-JAX reference mirroring the PyTorch forward exactly (f32).
    B, N, C = x.shape
    hd = C // num_heads
    q = (x[:, 0:1, :] @ wq.T).reshape(B, 1, num_heads, hd).transpose(0, 2, 1, 3)  # (B,H,1,hd)
    k = (x @ wk.T).reshape(B, N, num_heads, hd).transpose(0, 2, 1, 3)             # (B,H,N,hd)
    v = (x @ wv.T).reshape(B, N, num_heads, hd).transpose(0, 2, 1, 3)             # (B,H,N,hd)
    attn = (q @ jnp.swapaxes(k, -2, -1)) * scale                                  # (B,H,1,N)
    attn = jax.nn.softmax(attn, axis=-1)
    out = (attn @ v).transpose(0, 2, 1, 3).reshape(B, 1, C)
    return out @ wp.T + bp


if __name__ == "__main__":
    B, N, C = 2, 8, 32
    num_heads = 8

    key = jax.random.PRNGKey(0)
    kx, kq, kk, kv, kp, kb = jax.random.split(key, 6)
    x = jax.random.normal(kx, (B, N, C), dtype=jnp.float32)
    wq = jax.random.normal(kq, (C, C), dtype=jnp.float32) * 0.05
    wk = jax.random.normal(kk, (C, C), dtype=jnp.float32) * 0.05
    wv = jax.random.normal(kv, (C, C), dtype=jnp.float32) * 0.05
    wp = jax.random.normal(kp, (C, C), dtype=jnp.float32) * 0.05
    bp = jax.random.normal(kb, (C,), dtype=jnp.float32) * 0.05

    ref = None

    # f32 path: tight check of the restructured math against the reference.
    fwd32, scale, _ = make_cross_attention(B, N, C, num_heads=num_heads,
                                           compute_dtype=jnp.float32)
    out32 = jax.block_until_ready(fwd32(x, wq, wk, wv, wp, bp))
    ref = reference_cross_attention(x, wq, wk, wv, wp, bp, num_heads, scale)
    assert out32.shape == (B, 1, C)
    assert jnp.allclose(out32, ref, atol=1e-3, rtol=1e-3), "f32 mismatch vs reference"

    # bf16 path (production default: half the HBM/VMEM traffic, faster MXU);
    # accumulation and softmax remain in f32 inside the kernel.
    fwd16, _, _ = make_cross_attention(B, N, C, num_heads=num_heads,
                                       compute_dtype=jnp.bfloat16)
    out16 = jax.block_until_ready(fwd16(x, wq, wk, wv, wp, bp))
    assert out16.shape == (B, 1, C)
    assert jnp.allclose(out16, ref, atol=1.5e-2, rtol=1.5e-2), "bf16 mismatch vs reference"

    print("KERNEL_OK")
</pallas_src>

<mosaic_0001>
module attributes {stable_mosaic.version = 11 : i64} {
  func.func @kernel(%arg0: i32, %arg1: memref<1x2x32xf32, #tpu.memory_space<vmem>>, %arg2: memref<2x8x32xf32, #tpu.memory_space<vmem>>, %arg3: memref<32x32xf32, #tpu.memory_space<vmem>>, %arg4: memref<32x64xf32, #tpu.memory_space<vmem>>, %arg5: memref<32x32xf32, #tpu.memory_space<vmem>>, %arg6: memref<1x32xf32, #tpu.memory_space<vmem>>, %arg7: memref<8x32xf32, #tpu.memory_space<vmem>>, %arg8: memref<1x2x32xf32, #tpu.memory_space<vmem>>) attributes {dimension_semantics = [#tpu.dimension_semantics<parallel>], iteration_bounds = array<i64: 1>, scalar_prefetch = 0 : i64, scratch_operands = 0 : i64, tpu.core_type = #tpu.core_type<tc>, window_params = [{transform_indices = @transform_0, window_bounds = array<i64: 1, 2, 32>}, {transform_indices = @transform_1, window_bounds = array<i64: 2, 8, 32>}, {pipeline_mode = #tpu.pipeline_mode<synchronous>, transform_indices = @transform_2, window_bounds = array<i64: 32, 32>}, {pipeline_mode = #tpu.pipeline_mode<synchronous>, transform_indices = @transform_3, window_bounds = array<i64: 32, 64>}, {pipeline_mode = #tpu.pipeline_mode<synchronous>, transform_indices = @transform_4, window_bounds = array<i64: 32, 32>}, {pipeline_mode = #tpu.pipeline_mode<synchronous>, transform_indices = @transform_5, window_bounds = array<i64: 1, 32>}, {pipeline_mode = #tpu.pipeline_mode<synchronous>, transform_indices = @transform_6, window_bounds = array<i64: 8, 32>}, {transform_indices = @transform_7, window_bounds = array<i64: 1, 2, 32>}]} {
    %c0 = arith.constant 0 : index
    %c0_0 = arith.constant 0 : index
    %c0_1 = arith.constant 0 : index
    %0 = vector.load %arg1[%c0, %c0_0, %c0_1] : memref<1x2x32xf32, #tpu.memory_space<vmem>>, vector<1x2x32xf32>
    %1 = vector.shape_cast %0 : vector<1x2x32xf32> to vector<2x32xf32>
    %c0_2 = arith.constant 0 : index
    %c0_3 = arith.constant 0 : index
    %c0_4 = arith.constant 0 : index
    %2 = vector.load %arg2[%c0_2, %c0_3, %c0_4] : memref<2x8x32xf32, #tpu.memory_space<vmem>>, vector<2x8x32xf32>
    %c0_5 = arith.constant 0 : index
    %c0_6 = arith.constant 0 : index
    %3 = vector.load %arg7[%c0_5, %c0_6] : memref<8x32xf32, #tpu.memory_space<vmem>>, vector<8x32xf32>
    %c0_7 = arith.constant 0 : index
    %c0_8 = arith.constant 0 : index
    %4 = vector.load %arg3[%c0_7, %c0_8] : memref<32x32xf32, #tpu.memory_space<vmem>>, vector<32x32xf32>
    %cst = arith.constant dense<0.000000e+00> : vector<2x32xf32>
    %5 = tpu.matmul %1, %4, %cst {dimension_numbers = #tpu.dot_dimension_numbers<[1], [0], [0], [1], [0, 0, 1, 1], [], []>} : vector<2x32xf32>, vector<32x32xf32>, vector<2x32xf32> -> vector<2x32xf32>
    %6 = vector.shape_cast %2 : vector<2x8x32xf32> to vector<16x32xf32>
    %c0_9 = arith.constant 0 : index
    %c0_10 = arith.constant 0 : index
    %7 = vector.load %arg4[%c0_9, %c0_10] : memref<32x64xf32, #tpu.memory_space<vmem>>, vector<32x64xf32>
    %cst_11 = arith.constant dense<0.000000e+00> : vector<16x64xf32>
    %8 = tpu.matmul %6, %7, %cst_11 {dimension_numbers = #tpu.dot_dimension_numbers<[1], [0], [0], [1], [0, 0, 1, 1], [], []>} : vector<16x32xf32>, vector<32x64xf32>, vector<16x64xf32> -> vector<16x64xf32>
    %9 = vector.extract_strided_slice %8 {offsets = [0, 0], sizes = [16, 32], strides = [1, 1]} : vector<16x64xf32> to vector<16x32xf32>
    %10 = vector.shape_cast %9 : vector<16x32xf32> to vector<2x8x32xf32>
    %11 = vector.extract_strided_slice %8 {offsets = [0, 32], sizes = [16, 32], strides = [1, 1]} : vector<16x64xf32> to vector<16x32xf32>
    %12 = vector.shape_cast %11 : vector<16x32xf32> to vector<2x8x32xf32>
    %13 = vector.shape_cast %5 : vector<2x32xf32> to vector<2x1x32xf32>
    %14 = vector.shape_cast %3 : vector<8x32xf32> to vector<1x8x32xf32>
    %15 = vector.broadcast %13 : vector<2x1x32xf32> to vector<2x8x32xf32>
    %16 = vector.broadcast %14 : vector<1x8x32xf32> to vector<2x8x32xf32>
    %17 = arith.mulf %15, %16 : vector<2x8x32xf32>
    "tpu.trace_start"() <{level = 10 : i32, message = "bhc,bnc->bhn"}> : () -> ()
    %cst_12 = arith.constant dense<0.000000e+00> : vector<2x8x8xf32>
    %18 = tpu.matmul %17, %10, %cst_12 {dimension_numbers = #tpu.dot_dimension_numbers<[2], [2], [1], [1], [0, 0, 0, 1, 1, 1], [0], [0]>} : vector<2x8x32xf32>, vector<2x8x32xf32>, vector<2x8x8xf32> -> vector<2x8x8xf32>
    "tpu.trace_stop"() : () -> ()
    %cst_13 = arith.constant 5.000000e-01 : f32
    %19 = vector.broadcast %cst_13 : f32 to vector<2x8x8xf32>
    %20 = arith.mulf %18, %19 : vector<2x8x8xf32>
    %cst_14 = arith.constant dense<0xFF800000> : vector<2x8xf32>
    %21 = vector.multi_reduction <maximumf>, %20, %cst_14 [2] : vector<2x8x8xf32> to vector<2x8xf32>
    %22 = vector.shape_cast %21 : vector<2x8xf32> to vector<2x8x1xf32>
    %23 = vector.broadcast %22 : vector<2x8x1xf32> to vector<2x8x8xf32>
    %24 = arith.subf %20, %23 : vector<2x8x8xf32>
    %25 = math.exp %24 : vector<2x8x8xf32>
    %cst_15 = arith.constant dense<0.000000e+00> : vector<2x8xf32>
    %26 = vector.multi_reduction <add>, %25, %cst_15 [2] : vector<2x8x8xf32> to vector<2x8xf32>
    %27 = vector.shape_cast %26 : vector<2x8xf32> to vector<2x8x1xf32>
    %28 = vector.broadcast %27 : vector<2x8x1xf32> to vector<2x8x8xf32>
    %29 = arith.divf %25, %28 : vector<2x8x8xf32>
    "tpu.trace_start"() <{level = 10 : i32, message = "bhn,bnc->bhc"}> : () -> ()
    %cst_16 = arith.constant dense<0.000000e+00> : vector<2x8x32xf32>
    %30 = tpu.matmul %29, %12, %cst_16 {dimension_numbers = #tpu.dot_dimension_numbers<[2], [1], [1], [2], [0, 0, 0, 1, 1, 2], [0], [0]>} : vector<2x8x8xf32>, vector<2x8x32xf32>, vector<2x8x32xf32> -> vector<2x8x32xf32>
    "tpu.trace_stop"() : () -> ()
    %31 = vector.shape_cast %3 : vector<8x32xf32> to vector<1x8x32xf32>
    %32 = vector.broadcast %31 : vector<1x8x32xf32> to vector<2x8x32xf32>
    %33 = arith.mulf %30, %32 : vector<2x8x32xf32>
    %cst_17 = arith.constant dense<0.000000e+00> : vector<2x32xf32>
    %34 = vector.multi_reduction <add>, %33, %cst_17 [1] : vector<2x8x32xf32> to vector<2x32xf32>
    %c0_18 = arith.constant 0 : index
    %c0_19 = arith.constant 0 : index
    %35 = vector.load %arg5[%c0_18, %c0_19] : memref<32x32xf32, #tpu.memory_space<vmem>>, vector<32x32xf32>
    %cst_20 = arith.constant dense<0.000000e+00> : vector<2x32xf32>
    %36 = tpu.matmul %34, %35, %cst_20 {dimension_numbers = #tpu.dot_dimension_numbers<[1], [0], [0], [1], [0, 0, 1, 1], [], []>} : vector<2x32xf32>, vector<32x32xf32>, vector<2x32xf32> -> vector<2x32xf32>
    %c0_21 = arith.constant 0 : index
    %c0_22 = arith.constant 0 : index
    %37 = vector.load %arg6[%c0_21, %c0_22] : memref<1x32xf32, #tpu.memory_space<vmem>>, vector<1x32xf32>
    %38 = vector.broadcast %37 : vector<1x32xf32> to vector<2x32xf32>
    %39 = arith.addf %36, %38 : vector<2x32xf32>
    %c0_23 = arith.constant 0 : index
    %c0_24 = arith.constant 0 : index
    %c0_25 = arith.constant 0 : index
    %40 = vector.load %arg8[%c0_23, %c0_24, %c0_25] : memref<1x2x32xf32, #tpu.memory_space<vmem>>, vector<1x2x32xf32>
    %41 = vector.shape_cast %40 : vector<1x2x32xf32> to vector<2x32xf32>
    %42 = vector.shape_cast %39 : vector<2x32xf32> to vector<1x2x32xf32>
    tpu.vector_store %arg8[%c0_23, %c0_24, %c0_25], %42 {strides = array<i32>} : memref<1x2x32xf32, #tpu.memory_space<vmem>>, vector<1x2x32xf32>,
    return
  }
  func.func @transform_0(%arg0: i32) -> (i32, i32, i32) {
    %c0_i32 = arith.constant 0 : i32
    %c0_i32_0 = arith.constant 0 : i32
    %c0_i32_1 = arith.constant 0 : i32
    return %arg0, %c0_i32, %c0_i32_0 : i32, i32, i32
  }
  func.func @transform_1(%arg0: i32) -> (i32, i32, i32) {
    %c0_i32 = arith.constant 0 : i32
    %c0_i32_0 = arith.constant 0 : i32
    %c0_i32_1 = arith.constant 0 : i32
    return %arg0, %c0_i32, %c0_i32_0 : i32, i32, i32
  }
  func.func @transform_2(%arg0: i32) -> (i32, i32) {
    %c0_i32 = arith.constant 0 : i32
    %c0_i32_0 = arith.constant 0 : i32
    %c0_i32_1 = arith.constant 0 : i32
    return %c0_i32, %c0_i32_0 : i32, i32
  }
  func.func @transform_3(%arg0: i32) -> (i32, i32) {
    %c0_i32 = arith.constant 0 : i32
    %c0_i32_0 = arith.constant 0 : i32
    %c0_i32_1 = arith.constant 0 : i32
    return %c0_i32, %c0_i32_0 : i32, i32
  }
  func.func @transform_4(%arg0: i32) -> (i32, i32) {
    %c0_i32 = arith.constant 0 : i32
    %c0_i32_0 = arith.constant 0 : i32
    %c0_i32_1 = arith.constant 0 : i32
    return %c0_i32, %c0_i32_0 : i32, i32
  }
  func.func @transform_5(%arg0: i32) -> (i32, i32) {
    %c0_i32 = arith.constant 0 : i32
    %c0_i32_0 = arith.constant 0 : i32
    %c0_i32_1 = arith.constant 0 : i32
    return %c0_i32, %c0_i32_0 : i32, i32
  }
  func.func @transform_6(%arg0: i32) -> (i32, i32) {
    %c0_i32 = arith.constant 0 : i32
    %c0_i32_0 = arith.constant 0 : i32
    %c0_i32_1 = arith.constant 0 : i32
    return %c0_i32, %c0_i32_0 : i32, i32
  }
  func.func @transform_7(%arg0: i32) -> (i32, i32, i32) {
    %c0_i32 = arith.constant 0 : i32
    %c0_i32_0 = arith.constant 0 : i32
    %c0_i32_1 = arith.constant 0 : i32
    return %arg0, %c0_i32, %c0_i32_0 : i32, i32, i32
  }
}

module attributes {stable_mosaic.version = 11 : i64} {
  func.func @kernel(%arg0: i32, %arg1: memref<1x2x32xf32, #tpu.memory_space<vmem>>, %arg2: memref<2x8x32xf32, #tpu.memory_space<vmem>>, %arg3: memref<32x32xf32, #tpu.memory_space<vmem>>, %arg4: memref<32x64xf32, #tpu.memory_space<vmem>>, %arg5: memref<32x32xf32, #tpu.memory_space<vmem>>, %arg6: memref<1x32xf32, #tpu.memory_space<vmem>>, %arg7: memref<8x32xf32, #tpu.memory_space<vmem>>, %arg8: memref<1x2x32xf32, #tpu.memory_space<vmem>>) attributes {dimension_semantics = [#tpu.dimension_semantics<parallel>], iteration_bounds = array<i64: 1>, scalar_prefetch = 0 : i64, scratch_operands = 0 : i64, tpu.core_type = #tpu.core_type<tc>, window_params = [{transform_indices = @transform_0, window_bounds = array<i64: 1, 2, 32>}, {transform_indices = @transform_1, window_bounds = array<i64: 2, 8, 32>}, {pipeline_mode = #tpu.pipeline_mode<synchronous>, transform_indices = @transform_2, window_bounds = array<i64: 32, 32>}, {pipeline_mode = #tpu.pipeline_mode<synchronous>, transform_indices = @transform_3, window_bounds = array<i64: 32, 64>}, {pipeline_mode = #tpu.pipeline_mode<synchronous>, transform_indices = @transform_4, window_bounds = array<i64: 32, 32>}, {pipeline_mode = #tpu.pipeline_mode<synchronous>, transform_indices = @transform_5, window_bounds = array<i64: 1, 32>}, {pipeline_mode = #tpu.pipeline_mode<synchronous>, transform_indices = @transform_6, window_bounds = array<i64: 8, 32>}, {transform_indices = @transform_7, window_bounds = array<i64: 1, 2, 32>}]} {
    %c0 = arith.constant 0 : index
    %c0_0 = arith.constant 0 : index
    %c0_1 = arith.constant 0 : index
    %0 = vector.load %arg1[%c0, %c0_0, %c0_1] : memref<1x2x32xf32, #tpu.memory_space<vmem>>, vector<1x2x32xf32>
    %1 = vector.shape_cast %0 : vector<1x2x32xf32> to vector<2x32xf32>
    %c0_2 = arith.constant 0 : index
    %c0_3 = arith.constant 0 : index
    %c0_4 = arith.constant 0 : index
    %2 = vector.load %arg2[%c0_2, %c0_3, %c0_4] : memref<2x8x32xf32, #tpu.memory_space<vmem>>, vector<2x8x32xf32>
    %c0_5 = arith.constant 0 : index
    %c0_6 = arith.constant 0 : index
    %3 = vector.load %arg7[%c0_5, %c0_6] : memref<8x32xf32, #tpu.memory_space<vmem>>, vector<8x32xf32>
    %c0_7 = arith.constant 0 : index
    %c0_8 = arith.constant 0 : index
    %4 = vector.load %arg3[%c0_7, %c0_8] : memref<32x32xf32, #tpu.memory_space<vmem>>, vector<32x32xf32>
    %cst = arith.constant dense<0.000000e+00> : vector<2x32xf32>
    %5 = tpu.matmul %1, %4, %cst {dimension_numbers = #tpu.dot_dimension_numbers<[1], [0], [0], [1], [0, 0, 1, 1], [], []>} : vector<2x32xf32>, vector<32x32xf32>, vector<2x32xf32> -> vector<2x32xf32>
    %6 = vector.shape_cast %2 : vector<2x8x32xf32> to vector<16x32xf32>
    %c0_9 = arith.constant 0 : index
    %c0_10 = arith.constant 0 : index
    %7 = vector.load %arg4[%c0_9, %c0_10] : memref<32x64xf32, #tpu.memory_space<vmem>>, vector<32x64xf32>
    %cst_11 = arith.constant dense<0.000000e+00> : vector<16x64xf32>
    %8 = tpu.matmul %6, %7, %cst_11 {dimension_numbers = #tpu.dot_dimension_numbers<[1], [0], [0], [1], [0, 0, 1, 1], [], []>} : vector<16x32xf32>, vector<32x64xf32>, vector<16x64xf32> -> vector<16x64xf32>
    %9 = vector.extract_strided_slice %8 {offsets = [0, 0], sizes = [16, 32], strides = [1, 1]} : vector<16x64xf32> to vector<16x32xf32>
    %10 = vector.shape_cast %9 : vector<16x32xf32> to vector<2x8x32xf32>
    %11 = vector.extract_strided_slice %8 {offsets = [0, 32], sizes = [16, 32], strides = [1, 1]} : vector<16x64xf32> to vector<16x32xf32>
    %12 = vector.shape_cast %11 : vector<16x32xf32> to vector<2x8x32xf32>
    %13 = vector.shape_cast %5 : vector<2x32xf32> to vector<2x1x32xf32>
    %14 = vector.shape_cast %3 : vector<8x32xf32> to vector<1x8x32xf32>
    %15 = vector.broadcast %13 : vector<2x1x32xf32> to vector<2x8x32xf32>
    %16 = vector.broadcast %14 : vector<1x8x32xf32> to vector<2x8x32xf32>
    %17 = arith.mulf %15, %16 : vector<2x8x32xf32>
    "tpu.trace_start"() <{level = 10 : i32, message = "bhc,bnc->bhn"}> : () -> ()
    %cst_12 = arith.constant dense<0.000000e+00> : vector<2x8x8xf32>
    %18 = tpu.matmul %17, %10, %cst_12 {dimension_numbers = #tpu.dot_dimension_numbers<[2], [2], [1], [1], [0, 0, 0, 1, 1, 1], [0], [0]>} : vector<2x8x32xf32>, vector<2x8x32xf32>, vector<2x8x8xf32> -> vector<2x8x8xf32>
    "tpu.trace_stop"() : () -> ()
    %cst_13 = arith.constant 5.000000e-01 : f32
    %19 = vector.broadcast %cst_13 : f32 to vector<2x8x8xf32>
    %20 = arith.mulf %18, %19 : vector<2x8x8xf32>
    %cst_14 = arith.constant dense<0xFF800000> : vector<2x8xf32>
    %21 = vector.multi_reduction <maximumf>, %20, %cst_14 [2] : vector<2x8x8xf32> to vector<2x8xf32>
    %22 = vector.shape_cast %21 : vector<2x8xf32> to vector<2x8x1xf32>
    %23 = vector.broadcast %22 : vector<2x8x1xf32> to vector<2x8x8xf32>
    %24 = arith.subf %20, %23 : vector<2x8x8xf32>
    %25 = math.exp %24 : vector<2x8x8xf32>
    %cst_15 = arith.constant dense<0.000000e+00> : vector<2x8xf32>
    %26 = vector.multi_reduction <add>, %25, %cst_15 [2] : vector<2x8x8xf32> to vector<2x8xf32>
    %27 = vector.shape_cast %26 : vector<2x8xf32> to vector<2x8x1xf32>
    %28 = vector.broadcast %27 : vector<2x8x1xf32> to vector<2x8x8xf32>
    %29 = arith.divf %25, %28 : vector<2x8x8xf32>
    "tpu.trace_start"() <{level = 10 : i32, message = "bhn,bnc->bhc"}> : () -> ()
    %cst_16 = arith.constant dense<0.000000e+00> : vector<2x8x32xf32>
    %30 = tpu.matmul %29, %12, %cst_16 {dimension_numbers = #tpu.dot_dimension_numbers<[2], [1], [1], [2], [0, 0, 0, 1, 1, 2], [0], [0]>} : vector<2x8x8xf32>, vector<2x8x32xf32>, vector<2x8x32xf32> -> vector<2x8x32xf32>
    "tpu.trace_stop"() : () -> ()
    %31 = vector.shape_cast %3 : vector<8x32xf32> to vector<1x8x32xf32>
    %32 = vector.broadcast %31 : vector<1x8x32xf32> to vector<2x8x32xf32>
    %33 = arith.mulf %30, %32 : vector<2x8x32xf32>
    %cst_17 = arith.constant dense<0.000000e+00> : vector<2x32xf32>
    %34 = vector.multi_reduction <add>, %33, %cst_17 [1] : vector<2x8x32xf32> to vector<2x32xf32>
    %c0_18 = arith.constant 0 : index
    %c0_19 = arith.constant 0 : index
    %35 = vector.load %arg5[%c0_18, %c0_19] : memref<32x32xf32, #tpu.memory_space<vmem>>, vector<32x32xf32>
    %cst_20 = arith.constant dense<0.000000e+00> : vector<2x32xf32>
    %36 = tpu.matmul %34, %35, %cst_20 {dimension_numbers = #tpu.dot_dimension_numbers<[1], [0], [0], [1], [0, 0, 1, 1], [], []>} : vector<2x32xf32>, vector<32x32xf32>, vector<2x32xf32> -> vector<2x32xf32>
    %c0_21 = arith.constant 0 : index
    %c0_22 = arith.constant 0 : index
    %37 = vector.load %arg6[%c0_21, %c0_22] : memref<1x32xf32, #tpu.memory_space<vmem>>, vector<1x32xf32>
    %38 = vector.broadcast %37 : vector<1x32xf32> to vector<2x32xf32>
    %39 = arith.addf %36, %38 : vector<2x32xf32>
    %c0_23 = arith.constant 0 : index
    %c0_24 = arith.constant 0 : index
    %c0_25 = arith.constant 0 : index
    %40 = vector.load %arg8[%c0_23, %c0_24, %c0_25] : memref<1x2x32xf32, #tpu.memory_space<vmem>>, vector<1x2x32xf32>
    %41 = vector.shape_cast %40 : vector<1x2x32xf32> to vector<2x32xf32>
    %42 = vector.shape_cast %39 : vector<2x32xf32> to vector<1x2x32xf32>
    tpu.vector_store %arg8[%c0_23, %c0_24, %c0_25], %42 {strides = array<i32>} : memref<1x2x32xf32, #tpu.memory_space<vmem>>, vector<1x2x32xf32>,
    return
  }
  func.func @transform_0(%arg0: i32) -> (i32, i32, i32) {
    %c0_i32 = arith.constant 0 : i32
    %c0_i32_0 = arith.constant 0 : i32
    %c0_i32_1 = arith.constant 0 : i32
    return %arg0, %c0_i32, %c0_i32_0 : i32, i32, i32
  }
  func.func @transform_1(%arg0: i32) -> (i32, i32, i32) {
    %c0_i32 = arith.constant 0 : i32
    %c0_i32_0 = arith.constant 0 : i32
    %c0_i32_1 = arith.constant 0 : i32
    return %arg0, %c0_i32, %c0_i32_0 : i32, i32, i32
  }
  func.func @transform_2(%arg0: i32) -> (i32, i32) {
    %c0_i32 = arith.constant 0 : i32
    %c0_i32_0 = arith.constant 0 : i32
    %c0_i32_1 = arith.constant 0 : i32
    return %c0_i32, %c0_i32_0 : i32, i32
  }
  func.func @transform_3(%arg0: i32) -> (i32, i32) {
    %c0_i32 = arith.constant 0 : i32
    %c0_i32_0 = arith.constant 0 : i32
    %c0_i32_1 = arith.constant 0 : i32
    return %c0_i32, %c0_i32_0 : i32, i32
  }
  func.func @transform_4(%arg0: i32) -> (i32, i32) {
    %c0_i32 = arith.constant 0 : i32
    %c0_i32_0 = arith.constant 0 : i32
    %c0_i32_1 = arith.constant 0 : i32
    return %c0_i32, %c0_i32_0 : i32, i32
  }
  func.func @transform_5(%arg0: i32) -> (i32, i32) {
    %c0_i32 = arith.constant 0 : i32
    %c0_i32_0 = arith.constant 0 : i32
    %c0_i32_1 = arith.constant 0 : i32
    return %c0_i32, %c0_i32_0 : i32, i32
  }
  func.func @transform_6(%arg0: i32) -> (i32, i32) {
    %c0_i32 = arith.constant 0 : i32
    %c0_i32_0 = arith.constant 0 : i32
    %c0_i32_1 = arith.constant 0 : i32
    return %c0_i32, %c0_i32_0 : i32, i32
  }
  func.func @transform_7(%arg0: i32) -> (i32, i32, i32) {
    %c0_i32 = arith.constant 0 : i32
    %c0_i32_0 = arith.constant 0 : i32
    %c0_i32_1 = arith.constant 0 : i32
    return %arg0, %c0_i32, %c0_i32_0 : i32, i32, i32
  }
}

</mosaic_0001>

<llo_original>
// kernel: tpu_custom_call.1
$region0: #{tpu_custom_call.1}
  #allocation0 [shape = 'u32[]', space=smem, size = 0x4, offset = 0x4, fixed_abs, tag = 'smem constant byte address 0x4 - core index']
  #allocation1 [shape = 'u32[144,128]{1,0:T(1,128)}', space=vmem, size = 0x12000, scoped, tag = 'internal scratch']
  %s0 = inlined_call_operand.hbm [shape: f32[1,2,32], index: 0, kind: input, shape index: {}]
  %s1 = inlined_call_operand.hbm [shape: f32[2,8,32], index: 1, kind: input, shape index: {}]
  %s2 = inlined_call_operand.hbm [shape: f32[32,32], index: 2, kind: input, shape index: {}]
  %s3 = inlined_call_operand.hbm [shape: f32[32,64], index: 3, kind: input, shape index: {}]
  %s4 = inlined_call_operand.hbm [shape: f32[32,32], index: 4, kind: input, shape index: {}]
  %s5 = inlined_call_operand.vmem [shape: f32[1,32], index: 5, kind: input, shape index: {}]
  %s6 = inlined_call_operand.vmem [shape: f32[8,32], index: 6, kind: input, shape index: {}]
  %s7 = inlined_call_operand.hbm [shape: f32[1,2,32], index: 7, kind: output, shape index: {}]
  %s8 = sld [smem:[#allocation0]]
  $region58: #{tpu_custom_call.1} parent=0
    _
  %s10 = ssub.s32 1, %s8
  %s11 = scalar_select 0, %s10, %s8
  $region1: #{tpu_custom_call.1} parent=0
    #allocation2 [shape = 'u8[1024]{0}', space=vmem, size = 0x400, scoped, tag = 'input window, operand 0, single buffered']
    #allocation3 [shape = 's32[1]{0}', space=sflag, size = 0x4, scoped, tag = 'scoped memory for tpu_custom_call.1']
    #allocation4 [shape = 's32[1]{0}', space=sflag, size = 0x4, scoped, tag = 'scoped memory for tpu_custom_call.1']
    #allocation5 [shape = 'u8[8192]{0}', space=vmem, size = 0x2000, scoped, tag = 'input window, operand 1, single buffered']
    #allocation6 [shape = 's32[1]{0}', space=sflag, size = 0x4, scoped, tag = 'scoped memory for tpu_custom_call.1']
    #allocation7 [shape = 'u8[16384]{0}', space=vmem, size = 0x4000, scoped, tag = 'input window, operand 2, single buffered']
    #allocation8 [shape = 'u8[16384]{0}', space=vmem, size = 0x4000, scoped, tag = 'input window, operand 3, single buffered']
    #allocation9 [shape = 's32[1]{0}', space=sflag, size = 0x4, scoped, tag = 'scoped memory for tpu_custom_call.1']
    #allocation10 [shape = 'u8[16384]{0}', space=vmem, size = 0x4000, scoped, tag = 'input window, operand 4, single buffered']
    #allocation11 [shape = 'u8[1024]{0}', space=vmem, size = 0x400, scoped, tag = 'output window, operand 0, single buffered']
    %12 = vsyncpa [#allocation3], 0
    %13 = vsyncpa [#allocation6], 0
    %14 = vsyncpa [#allocation9], 0
    %15 = vsyncpa [#allocation4], 0
    // Predicated region
    $region2: #{tpu_custom_call.1} parent=1 // pred_check
      _
    $region3: #{tpu_custom_call.1} parent=1 // pred_check_branch
      %17 = sbr.rel (0) target = $region5
    $region4: #{tpu_custom_call.1} parent=1 // pred_region
      %s19 = ssub.s32 32, 32
      %20 = vsyncadd [#allocation3], %s19
      %s22 = sshll.u32 [#allocation2], 4
      %s23 = int_to_ptr.vmem [resolvable:$true] %s22
      %25 = dma.hbm_to_vmem [thread:$0]  %s0, 32, %s23, [#allocation3]
    $region5: #{tpu_custom_call.1} parent=1 // pred_fallthru
      _
    // Predicated region
    $region6: #{tpu_custom_call.1} parent=1 // pred_check
      _
    $region7: #{tpu_custom_call.1} parent=1 // pred_check_branch
      %27 = sbr.rel (0) target = $region9
    $region8: #{tpu_custom_call.1} parent=1 // pred_region
      %s29 = ssub.s32 256, 256
      %30 = vsyncadd [#allocation6], %s29
      %s31 = sshll.u32 [#allocation5], 4
      %s32 = int_to_ptr.vmem [resolvable:$true] %s31
      %37 = dma.hbm_to_vmem [thread:$0]  %s1, 256, %s32, [#allocation6], 128, 128, 8
    $region9: #{tpu_custom_call.1} parent=1 // pred_fallthru
      _
    // Predicated region
    $region10: #{tpu_custom_call.1} parent=1 // pred_check
      _
    $region11: #{tpu_custom_call.1} parent=1 // pred_check_branch
      %39 = sbr.rel (0) target = $region13
    $region12: #{tpu_custom_call.1} parent=1 // pred_region
      %s41 = ssub.s32 512, 512
      %42 = vsyncadd [#allocation6], %s41
      %s43 = sshll.u32 [#allocation7], 4
      %s44 = int_to_ptr.vmem [resolvable:$true] %s43
      %49 = dma.hbm_to_vmem [thread:$0]  %s2, 512, %s44, [#allocation6], 128, 128, 8
    $region13: #{tpu_custom_call.1} parent=1 // pred_fallthru
      _
    // Predicated region
    $region14: #{tpu_custom_call.1} parent=1 // pred_check
      _
    $region15: #{tpu_custom_call.1} parent=1 // pred_check_branch
      %51 = sbr.rel (0) target = $region17
    $region16: #{tpu_custom_call.1} parent=1 // pred_region
      %s53 = ssub.s32 512, 512
      %54 = vsyncadd [#allocation9], %s53
      %s55 = sshll.u32 [#allocation8], 4
      %s56 = int_to_ptr.vmem [resolvable:$true] %s55
      %61 = dma.hbm_to_vmem [thread:$0]  %s3, 512, %s56, [#allocation9], 128, 128, 8
    $region17: #{tpu_custom_call.1} parent=1 // pred_fallthru
      _
    // Predicated region
    $region18: #{tpu_custom_call.1} parent=1 // pred_check
      _
    $region19: #{tpu_custom_call.1} parent=1 // pred_check_branch
      %63 = sbr.rel (0) target = $region21
    $region20: #{tpu_custom_call.1} parent=1 // pred_region
      %s65 = ssub.s32 512, 512
      %66 = vsyncadd [#allocation9], %s65
      %s67 = sshll.u32 [#allocation10], 4
      %s68 = int_to_ptr.vmem [resolvable:$true] %s67
      %73 = dma.hbm_to_vmem [thread:$0]  %s4, 512, %s68, [#allocation9], 128, 128, 8
    $region21: #{tpu_custom_call.1} parent=1 // pred_fallthru
      _
    // Predicated region
    $region22: #{tpu_custom_call.1} parent=1 // pred_check
      _
    $region23: #{tpu_custom_call.1} parent=1 // pred_check_branch
      %75 = sbr.rel (0) target = $region25
    $region24: #{tpu_custom_call.1} parent=1 // pred_region
      _
    $region25: #{tpu_custom_call.1} parent=1 // pred_fallthru
      _
    // Predicated region
    $region26: #{tpu_custom_call.1} parent=1 // pred_check
      _
    $region27: #{tpu_custom_call.1} parent=1 // pred_check_branch
      %77 = sbr.rel (0) target = $region29
    $region28: #{tpu_custom_call.1} parent=1 // pred_region
      _
    $region29: #{tpu_custom_call.1} parent=1 // pred_fallthru
      _
    // Predicated region
    $region30: #{tpu_custom_call.1} parent=1 // pred_check
      _
    $region31: #{tpu_custom_call.1} parent=1 // pred_check_branch
      %79 = sbr.rel (0) target = $region33
    $region32: #{tpu_custom_call.1} parent=1 // pred_region
      %80 = dma.done [#allocation3], 32
    $region33: #{tpu_custom_call.1} parent=1 // pred_fallthru
      _
    // Predicated region
    $region34: #{tpu_custom_call.1} parent=1 // pred_check
      _
    $region35: #{tpu_custom_call.1} parent=1 // pred_check_branch
      %82 = sbr.rel (0) target = $region37
    $region36: #{tpu_custom_call.1} parent=1 // pred_region
      %83 = dma.done [#allocation6], 256
    $region37: #{tpu_custom_call.1} parent=1 // pred_fallthru
      _
    // Predicated region
    $region38: #{tpu_custom_call.1} parent=1 // pred_check
      _
    $region39: #{tpu_custom_call.1} parent=1 // pred_check_branch
      %85 = sbr.rel (0) target = $region41
    $region40: #{tpu_custom_call.1} parent=1 // pred_region
      %86 = dma.done [#allocation6], 512
    $region41: #{tpu_custom_call.1} parent=1 // pred_fallthru
      _
    // Predicated region
    $region42: #{tpu_custom_call.1} parent=1 // pred_check
      _
    $region43: #{tpu_custom_call.1} parent=1 // pred_check_branch
      %88 = sbr.rel (0) target = $region45
    $region44: #{tpu_custom_call.1} parent=1 // pred_region
      %89 = dma.done [#allocation9], 512
    $region45: #{tpu_custom_call.1} parent=1 // pred_fallthru
      _
    // Predicated region
    $region46: #{tpu_custom_call.1} parent=1 // pred_check
      _
    $region47: #{tpu_custom_call.1} parent=1 // pred_check_branch
      %91 = sbr.rel (0) target = $region49
    $region48: #{tpu_custom_call.1} parent=1 // pred_region
      %92 = dma.done [#allocation9], 512
    $region49: #{tpu_custom_call.1} parent=1 // pred_fallthru
      _
    %v93 = vld [vmem:[#allocation2] sm:$0x3]
    %v94 = vld [vmem:[#allocation5] sm:$0xff]
    %v95 = vld [vmem:[#allocation5 + $0x8] sm:$0xff]
    %v96 = vld [vmem:[%s6] sm:$0xff]
    %v97 = vld [vmem:[#allocation7] sm:$0xff]
    %v98 = vld [vmem:[#allocation7 + $0x8] sm:$0xff]
    %v99 = vld [vmem:[#allocation7 + $0x10] sm:$0xff]
    %v100 = vld [vmem:[#allocation7 + $0x18] sm:$0xff]
    %vm101 = vcmask 261120
    %v103 = vsel %vm101, %v93, 0
    %105 = vmatprep.subr.mxu0 0.0
    %106 = vmatpush1.msra.mxu0 %v97
    %107 = vmatprep.subr.mxu0 0.0
    %108 = vmatpush1.msra.mxu0 %v98
    %109 = vmatprep.subr.mxu0 0.0
    %110 = vmatpush1.msra.mxu0 %v99
    %111 = vmatprep.subr.mxu0 0.0
    %112 = vmatpush1.msra.mxu0 %v100
    %113 = vmatprep.subr.mxu0 0.0
    %114 = vmatpush1.msra.mxu0 0.0
    %115 = vmatprep.subr.mxu0 0.0
    %116 = vmatpush1.msra.mxu0 0.0
    %117 = vmatprep.subr.mxu0 0.0
    %118 = vmatpush1.msra.mxu0 0.0
    %119 = vmatprep.subr.mxu0 0.0
    %120 = vmatpush1.msra.mxu0 0.0
    %121 = vmatprep.subr.mxu0 0.0
    %122 = vmatpush1.msra.mxu0 0.0
    %123 = vmatprep.subr.mxu0 0.0
    %124 = vmatpush1.msra.mxu0 0.0
    %125 = vmatprep.subr.mxu0 0.0
    %126 = vmatpush1.msra.mxu0 0.0
    %127 = vmatprep.subr.mxu0 0.0
    %128 = vmatpush1.msra.mxu0 0.0
    %129 = vmatprep.subr.mxu0 0.0
    %130 = vmatpush1.msra.mxu0 0.0
    %131 = vmatprep.subr.mxu0 0.0
    %132 = vmatpush1.msra.mxu0 0.0
    %133 = vmatprep.subr.mxu0 0.0
    %134 = vmatpush1.msra.mxu0 0.0
    %135 = vmatprep.subr.mxu0 0.0
    %136 = vmatpush1.msra.mxu0 0.0
    %137 = vmatprep.subr.mxu0 0.0
    %138 = vmatpush1.msra.mxu0 0.0
    %139 = vmatprep.subr.mxu0 0.0
    %140 = vmatpush1.msra.mxu0 0.0
    %141 = vmatprep.subr.mxu0 0.0
    %142 = vmatpush1.msra.mxu0 0.0
    %143 = vmatprep.subr.mxu0 0.0
    %144 = vmatpush1.msra.mxu0 0.0
    %145 = vmatprep.subr.mxu0 0.0
    %146 = vmatpush1.msra.mxu0 0.0
    %147 = vmatprep.subr.mxu0 0.0
    %148 = vmatpush1.msra.mxu0 0.0
    %149 = vmatprep.subr.mxu0 0.0
    %150 = vmatpush1.msra.mxu0 0.0
    %151 = vmatprep.subr.mxu0 0.0
    %152 = vmatpush1.msra.mxu0 0.0
    %153 = vmatprep.subr.mxu0 0.0
    %154 = vmatpush1.msra.mxu0 0.0
    %155 = vmatprep.subr.mxu0 0.0
    %156 = vmatpush1.msra.mxu0 0.0
    %157 = vmatprep.subr.mxu0 0.0
    %158 = vmatpush1.msra.mxu0 0.0
    %159 = vmatprep.subr.mxu0 0.0
    %160 = vmatpush1.msra.mxu0 0.0
    %161 = vmatprep.subr.mxu0 0.0
    %162 = vmatpush1.msra.mxu0 0.0
    %163 = vmatprep.subr.mxu0 0.0
    %164 = vmatpush1.msra.mxu0 0.0
    %165 = vmatprep.subr.mxu0 0.0
    %166 = vmatpush1.msra.mxu0 0.0
    %167 = vmatprep.subr.mxu0 0.0
    %168 = vmatpush1.msra.mxu0 0.0
    %169 = vmatprep.mubr.f32.mxu0 0.0
    %170 = vmatmul.mubr.f32.gmra.mrb[0].mxu0 %v103
    %v171 = vpop.f32.mrb[0].mxu0
    %v172 = vadd.f32 0.0, %v171
    %v173 = vpop.f32.mrb[0].mxu0
    %174 = vdwg.mxu0
    %v175 = vld [vmem:[#allocation8] sm:$0xff]
    %v176 = vld [vmem:[#allocation8 + $0x8] sm:$0xff]
    %v177 = vld [vmem:[#allocation8 + $0x10] sm:$0xff]
    %v178 = vld [vmem:[#allocation8 + $0x18] sm:$0xff]
    %v180 = vsel %vm101, %v94, 0
    %v183 = vsel %vm101, %v95, 0
    %185 = vmatprep.subr.mxu0 0.0
    %186 = vmatpush1.msra.mxu0 %v175
    %187 = vmatprep.subr.mxu0 0.0
    %188 = vmatpush1.msra.mxu0 %v176
    %189 = vmatprep.subr.mxu0 0.0
    %190 = vmatpush1.msra.mxu0 %v177
    %191 = vmatprep.subr.mxu0 0.0
    %192 = vmatpush1.msra.mxu0 %v178
    %193 = vmatprep.subr.mxu0 0.0
    %194 = vmatpush1.msra.mxu0 0.0
    %195 = vmatprep.subr.mxu0 0.0
    %196 = vmatpush1.msra.mxu0 0.0
    %197 = vmatprep.subr.mxu0 0.0
    %198 = vmatpush1.msra.mxu0 0.0
    %199 = vmatprep.subr.mxu0 0.0
    %200 = vmatpush1.msra.mxu0 0.0
    %201 = vmatprep.subr.mxu0 0.0
    %202 = vmatpush1.msra.mxu0 0.0
    %203 = vmatprep.subr.mxu0 0.0
    %204 = vmatpush1.msra.mxu0 0.0
    %205 = vmatprep.subr.mxu0 0.0
    %206 = vmatpush1.msra.mxu0 0.0
    %207 = vmatprep.subr.mxu0 0.0
    %208 = vmatpush1.msra.mxu0 0.0
    %209 = vmatprep.subr.mxu0 0.0
    %210 = vmatpush1.msra.mxu0 0.0
    %211 = vmatprep.subr.mxu0 0.0
    %212 = vmatpush1.msra.mxu0 0.0
    %213 = vmatprep.subr.mxu0 0.0
    %214 = vmatpush1.msra.mxu0 0.0
    %215 = vmatprep.subr.mxu0 0.0
    %216 = vmatpush1.msra.mxu0 0.0
    %217 = vmatprep.subr.mxu0 0.0
    %218 = vmatpush1.msra.mxu0 0.0
    %219 = vmatprep.subr.mxu0 0.0
    %220 = vmatpush1.msra.mxu0 0.0
    %221 = vmatprep.subr.mxu0 0.0
    %222 = vmatpush1.msra.mxu0 0.0
    %223 = vmatprep.subr.mxu0 0.0
    %224 = vmatpush1.msra.mxu0 0.0
    %225 = vmatprep.subr.mxu0 0.0
    %226 = vmatpush1.msra.mxu0 0.0
    %227 = vmatprep.subr.mxu0 0.0
    %228 = vmatpush1.msra.mxu0 0.0
    %229 = vmatprep.subr.mxu0 0.0
    %230 = vmatpush1.msra.mxu0 0.0
    %231 = vmatprep.subr.mxu0 0.0
    %232 = vmatpush1.msra.mxu0 0.0
    %233 = vmatprep.subr.mxu0 0.0
    %234 = vmatpush1.msra.mxu0 0.0
    %235 = vmatprep.subr.mxu0 0.0
    %236 = vmatpush1.msra.mxu0 0.0
    %237 = vmatprep.subr.mxu0 0.0
    %238 = vmatpush1.msra.mxu0 0.0
    %239 = vmatprep.subr.mxu0 0.0
    %240 = vmatpush1.msra.mxu0 0.0
    %241 = vmatprep.subr.mxu0 0.0
    %242 = vmatpush1.msra.mxu0 0.0
    %243 = vmatprep.subr.mxu0 0.0
    %244 = vmatpush1.msra.mxu0 0.0
    %245 = vmatprep.subr.mxu0 0.0
    %246 = vmatpush1.msra.mxu0 0.0
    %247 = vmatprep.subr.mxu0 0.0
    %248 = vmatpush1.msra.mxu0 0.0
    %249 = vmatprep.mubr.f32.mxu0 0.0
    %250 = vmatmul.mubr.f32.gmra.mrb[0].mxu0 %v180
    %v251 = vpop.f32.mrb[0].mxu0
    %v252 = vadd.f32 0.0, %v251
    %v253 = vpop.f32.mrb[0].mxu0
    %254 = vmatprep.mubr.f32.mxu0 0.0
    %255 = vmatmul.mubr.f32.gmra.mrb[0].mxu0 %v183
    %v256 = vpop.f32.mrb[0].mxu0
    %v257 = vadd.f32 0.0, %v256
    %v258 = vpop.f32.mrb[0].mxu0
    %259 = vdwg.mxu0
    %v262 = vunpack.c.l.s4 1966171168
    %v263 = vunpack.c.0.s8 %v262
    %v264 = vlaneseq
    %v265 = vshrl.u32 %v264, 7
    %v266 = vsub.s32 %v263, %v265
    %v267 = vrot.slane %v172, %v266
    %v268 = vcombine.high %v267, %v267
    %v270 = vunpack.c.l.s4 1966171168
    %v271 = vunpack.c.0.s8 %v270
    %v272 = vlaneseq
    %v273 = vshrl.u32 %v272, 7
    %v274 = vsub.s32 %v271, %v273
    %v275 = vrot.slane %v267, %v274
    %v277 = vunpack.c.l.s4 1966171168
    %v278 = vunpack.c.0.s8 %v277
    %v279 = vlaneseq
    %v280 = vshrl.u32 %v279, 7
    %v281 = vsub.s32 %v278, %v280
    %v282 = vrot.slane %v268, %v281
    %v283 = vlaneseq
    %v284 = vshrl.u32 %v283, 7
    %v285 = vsub.s32 0, %v284
    %v286 = vrot.slane %v275, %v285
    %v287 = vlaneseq
    %v288 = vshrl.u32 %v287, 7
    %v289 = vsub.s32 0, %v288
    %v290 = vrot.slane %v282, %v289
    %v293 = vmul.f32 %v286, %v96
    %v294 = vmul.f32 %v290, %v96
    %v296 = vsel %vm101, %v293, 0
    %v299 = vsel %vm101, %v252, 0
    %301 = vmatprep.subr.mxu0 0.0
    %302 = vmatpush1.xpose.msra.mxu0 %v299
    %303 = vmatprep.subr.mxu0 0.0
    %304 = vmatpush1.xpose.msra.mxu0 0.0
    %305 = vmatprep.subr.mxu0 0.0
    %306 = vmatpush1.xpose.msra.mxu0 0.0
    %307 = vmatprep.subr.mxu0 0.0
    %308 = vmatpush1.xpose.msra.mxu0 0.0
    %309 = vmatprep.subr.mxu0 0.0
    %310 = vmatpush1.xpose.msra.mxu0 0.0
    %311 = vmatprep.subr.mxu0 0.0
    %312 = vmatpush1.xpose.msra.mxu0 0.0
    %313 = vmatprep.subr.mxu0 0.0
    %314 = vmatpush1.xpose.msra.mxu0 0.0
    %315 = vmatprep.subr.mxu0 0.0
    %316 = vmatpush1.xpose.msra.mxu0 0.0
    %317 = vmatprep.subr.mxu0 0.0
    %318 = vmatpush1.xpose.msra.mxu0 0.0
    %319 = vmatprep.subr.mxu0 0.0
    %320 = vmatpush1.xpose.msra.mxu0 0.0
    %321 = vmatprep.subr.mxu0 0.0
    %322 = vmatpush1.xpose.msra.mxu0 0.0
    %323 = vmatprep.subr.mxu0 0.0
    %324 = vmatpush1.xpose.msra.mxu0 0.0
    %325 = vmatprep.subr.mxu0 0.0
    %326 = vmatpush1.xpose.msra.mxu0 0.0
    %327 = vmatprep.subr.mxu0 0.0
    %328 = vmatpush1.xpose.msra.mxu0 0.0
    %329 = vmatprep.subr.mxu0 0.0
    %330 = vmatpush1.xpose.msra.mxu0 0.0
    %331 = vmatprep.subr.mxu0 0.0
    %332 = vmatpush1.xpose.msra.mxu0 0.0
    %333 = vmatprep.subr.mxu0 0.0
    %334 = vmatpush1.xpose.msra.mxu0 0.0
    %335 = vmatprep.subr.mxu0 0.0
    %336 = vmatpush1.xpose.msra.mxu0 0.0
    %337 = vmatprep.subr.mxu0 0.0
    %338 = vmatpush1.xpose.msra.mxu0 0.0
    %339 = vmatprep.subr.mxu0 0.0
    %340 = vmatpush1.xpose.msra.mxu0 0.0
    %341 = vmatprep.subr.mxu0 0.0
    %342 = vmatpush1.xpose.msra.mxu0 0.0
    %343 = vmatprep.subr.mxu0 0.0
    %344 = vmatpush1.xpose.msra.mxu0 0.0
    %345 = vmatprep.subr.mxu0 0.0
    %346 = vmatpush1.xpose.msra.mxu0 0.0
    %347 = vmatprep.subr.mxu0 0.0
    %348 = vmatpush1.xpose.msra.mxu0 0.0
    %349 = vmatprep.subr.mxu0 0.0
    %350 = vmatpush1.xpose.msra.mxu0 0.0
    %351 = vmatprep.subr.mxu0 0.0
    %352 = vmatpush1.xpose.msra.mxu0 0.0
    %353 = vmatprep.subr.mxu0 0.0
    %354 = vmatpush1.xpose.msra.mxu0 0.0
    %355 = vmatprep.subr.mxu0 0.0
    %356 = vmatpush1.xpose.msra.mxu0 0.0
    %357 = vmatprep.subr.mxu0 0.0
    %358 = vmatpush1.xpose.msra.mxu0 0.0
    %359 = vmatprep.subr.mxu0 0.0
    %360 = vmatpush1.xpose.msra.mxu0 0.0
    %361 = vmatprep.subr.mxu0 0.0
    %362 = vmatpush1.xpose.msra.mxu0 0.0
    %363 = vmatprep.subr.mxu0 0.0
    %364 = vmatpush1.xpose.msra.mxu0 0.0
    %365 = vmatprep.mubr.f32.mxu0 0.0
    %366 = vmatmul.mubr.f32.gmra.mrb[0].mxu0 %v296
    %v367 = vpop.f32.mrb[0].mxu0
    %v368 = vadd.f32 0.0, %v367
    %v369 = vpop.f32.mrb[0].mxu0
    %370 = vdwg.mxu0
    %v372 = vsel %vm101, %v294, 0
    %v375 = vsel %vm101, %v257, 0
    %377 = vmatprep.subr.mxu0 0.0
    %378 = vmatpush1.xpose.msra.mxu0 %v375
    %379 = vmatprep.subr.mxu0 0.0
    %380 = vmatpush1.xpose.msra.mxu0 0.0
    %381 = vmatprep.subr.mxu0 0.0
    %382 = vmatpush1.xpose.msra.mxu0 0.0
    %383 = vmatprep.subr.mxu0 0.0
    %384 = vmatpush1.xpose.msra.mxu0 0.0
    %385 = vmatprep.subr.mxu0 0.0
    %386 = vmatpush1.xpose.msra.mxu0 0.0
    %387 = vmatprep.subr.mxu0 0.0
    %388 = vmatpush1.xpose.msra.mxu0 0.0
    %389 = vmatprep.subr.mxu0 0.0
    %390 = vmatpush1.xpose.msra.mxu0 0.0
    %391 = vmatprep.subr.mxu0 0.0
    %392 = vmatpush1.xpose.msra.mxu0 0.0
    %393 = vmatprep.subr.mxu0 0.0
    %394 = vmatpush1.xpose.msra.mxu0 0.0
    %395 = vmatprep.subr.mxu0 0.0
    %396 = vmatpush1.xpose.msra.mxu0 0.0
    %397 = vmatprep.subr.mxu0 0.0
    %398 = vmatpush1.xpose.msra.mxu0 0.0
    %399 = vmatprep.subr.mxu0 0.0
    %400 = vmatpush1.xpose.msra.mxu0 0.0
    %401 = vmatprep.subr.mxu0 0.0
    %402 = vmatpush1.xpose.msra.mxu0 0.0
    %403 = vmatprep.subr.mxu0 0.0
    %404 = vmatpush1.xpose.msra.mxu0 0.0
    %405 = vmatprep.subr.mxu0 0.0
    %406 = vmatpush1.xpose.msra.mxu0 0.0
    %407 = vmatprep.subr.mxu0 0.0
    %408 = vmatpush1.xpose.msra.mxu0 0.0
    %409 = vmatprep.subr.mxu0 0.0
    %410 = vmatpush1.xpose.msra.mxu0 0.0
    %411 = vmatprep.subr.mxu0 0.0
    %412 = vmatpush1.xpose.msra.mxu0 0.0
    %413 = vmatprep.subr.mxu0 0.0
    %414 = vmatpush1.xpose.msra.mxu0 0.0
    %415 = vmatprep.subr.mxu0 0.0
    %416 = vmatpush1.xpose.msra.mxu0 0.0
    %417 = vmatprep.subr.mxu0 0.0
    %418 = vmatpush1.xpose.msra.mxu0 0.0
    %419 = vmatprep.subr.mxu0 0.0
    %420 = vmatpush1.xpose.msra.mxu0 0.0
    %421 = vmatprep.subr.mxu0 0.0
    %422 = vmatpush1.xpose.msra.mxu0 0.0
    %423 = vmatprep.subr.mxu0 0.0
    %424 = vmatpush1.xpose.msra.mxu0 0.0
    %425 = vmatprep.subr.mxu0 0.0
    %426 = vmatpush1.xpose.msra.mxu0 0.0
    %427 = vmatprep.subr.mxu0 0.0
    %428 = vmatpush1.xpose.msra.mxu0 0.0
    %429 = vmatprep.subr.mxu0 0.0
    %430 = vmatpush1.xpose.msra.mxu0 0.0
    %431 = vmatprep.subr.mxu0 0.0
    %432 = vmatpush1.xpose.msra.mxu0 0.0
    %433 = vmatprep.subr.mxu0 0.0
    %434 = vmatpush1.xpose.msra.mxu0 0.0
    %435 = vmatprep.subr.mxu0 0.0
    %436 = vmatpush1.xpose.msra.mxu0 0.0
    %437 = vmatprep.subr.mxu0 0.0
    %438 = vmatpush1.xpose.msra.mxu0 0.0
    %439 = vmatprep.subr.mxu0 0.0
    %440 = vmatpush1.xpose.msra.mxu0 0.0
    %441 = vmatprep.mubr.f32.mxu0 0.0
    %442 = vmatmul.mubr.f32.gmra.mrb[0].mxu0 %v372
    %v443 = vpop.f32.mrb[0].mxu0
    %v444 = vadd.f32 0.0, %v443
    %v445 = vpop.f32.mrb[0].mxu0
    %446 = vdwg.mxu0
    %v447 = vmul.f32 %v368, 0.5
    %v448 = vmul.f32 %v444, 0.5
    %vm449 = vcmask 64512
    %v450 = vsel %vm449, %v447, -inf
    %451 = vmax.xlane.f32.xlu0 %v450
    %v452 = vpop.xlane.xlu0 %451
    %v453 = vsel %vm449, %v448, -inf
    %454 = vmax.xlane.f32.xlu0 %v453
    %v455 = vpop.xlane.xlu0 %454
    %v456 = vsub.f32 %v447, %v452
    %v457 = vsub.f32 %v448, %v455
    %v458 = vmul.f32 %v456, 1.442695
    %v459 = vpow.pop %v458
    %v460 = vmul.f32 %v457, 1.442695
    %v461 = vpow.pop %v460
    %v462 = vsel %vm449, %v459, 0.0
    %463 = vadd.xlane.f32.xlu0 %v462
    %v464 = vpop.xlane.xlu0 %463
    %v465 = vsel %vm449, %v461, 0.0
    %466 = vadd.xlane.f32.xlu0 %v465
    %v467 = vpop.xlane.xlu0 %466
    %v468 = vrcp.pop %v464
    %v469 = vmul.f32 %v459, %v468
    %v470 = vrcp.pop %v467
    %v471 = vmul.f32 %v461, %v470
    %472 = vrot.lane.b32.xlu0 %v252, 96
    %v473 = vpop.permute.xlu0 %472
    %v476 = vsel %vm449, %v469, 0
    %478 = vmatprep.subr.mxu0 0.0
    %479 = vmatpush1.msra.mxu0 %v473
    %480 = vmatprep.subr.mxu0 0.0
    %481 = vmatpush1.msra.mxu0 0.0
    %482 = vmatprep.subr.mxu0 0.0
    %483 = vmatpush1.msra.mxu0 0.0
    %484 = vmatprep.subr.mxu0 0.0
    %485 = vmatpush1.msra.mxu0 0.0
    %486 = vmatprep.subr.mxu0 0.0
    %487 = vmatpush1.msra.mxu0 0.0
    %488 = vmatprep.subr.mxu0 0.0
    %489 = vmatpush1.msra.mxu0 0.0
    %490 = vmatprep.subr.mxu0 0.0
    %491 = vmatpush1.msra.mxu0 0.0
    %492 = vmatprep.subr.mxu0 0.0
    %493 = vmatpush1.msra.mxu0 0.0
    %494 = vmatprep.subr.mxu0 0.0
    %495 = vmatpush1.msra.mxu0 0.0
    %496 = vmatprep.subr.mxu0 0.0
    %497 = vmatpush1.msra.mxu0 0.0
    %498 = vmatprep.subr.mxu0 0.0
    %499 = vmatpush1.msra.mxu0 0.0
    %500 = vmatprep.subr.mxu0 0.0
    %501 = vmatpush1.msra.mxu0 0.0
    %502 = vmatprep.subr.mxu0 0.0
    %503 = vmatpush1.msra.mxu0 0.0
    %504 = vmatprep.subr.mxu0 0.0
    %505 = vmatpush1.msra.mxu0 0.0
    %506 = vmatprep.subr.mxu0 0.0
    %507 = vmatpush1.msra.mxu0 0.0
    %508 = vmatprep.subr.mxu0 0.0
    %509 = vmatpush1.msra.mxu0 0.0
    %510 = vmatprep.subr.mxu0 0.0
    %511 = vmatpush1.msra.mxu0 0.0
    %512 = vmatprep.subr.mxu0 0.0
    %513 = vmatpush1.msra.mxu0 0.0
    %514 = vmatprep.subr.mxu0 0.0
    %515 = vmatpush1.msra.mxu0 0.0
    %516 = vmatprep.subr.mxu0 0.0
    %517 = vmatpush1.msra.mxu0 0.0
    %518 = vmatprep.subr.mxu0 0.0
    %519 = vmatpush1.msra.mxu0 0.0
    %520 = vmatprep.subr.mxu0 0.0
    %521 = vmatpush1.msra.mxu0 0.0
    %522 = vmatprep.subr.mxu0 0.0
    %523 = vmatpush1.msra.mxu0 0.0
    %524 = vmatprep.subr.mxu0 0.0
    %525 = vmatpush1.msra.mxu0 0.0
    %526 = vmatprep.subr.mxu0 0.0
    %527 = vmatpush1.msra.mxu0 0.0
    %528 = vmatprep.subr.mxu0 0.0
    %529 = vmatpush1.msra.mxu0 0.0
    %530 = vmatprep.subr.mxu0 0.0
    %531 = vmatpush1.msra.mxu0 0.0
    %532 = vmatprep.subr.mxu0 0.0
    %533 = vmatpush1.msra.mxu0 0.0
    %534 = vmatprep.subr.mxu0 0.0
    %535 = vmatpush1.msra.mxu0 0.0
    %536 = vmatprep.subr.mxu0 0.0
    %537 = vmatpush1.msra.mxu0 0.0
    %538 = vmatprep.subr.mxu0 0.0
    %539 = vmatpush1.msra.mxu0 0.0
    %540 = vmatprep.subr.mxu0 0.0
    %541 = vmatpush1.msra.mxu0 0.0
    %542 = vmatprep.mubr.f32.mxu0 0.0
    %543 = vmatmul.mubr.f32.gmra.mrb[0].mxu0 %v476
    %v544 = vpop.f32.mrb[0].mxu0
    %v545 = vadd.f32 0.0, %v544
    %v546 = vpop.f32.mrb[0].mxu0
    %547 = vdwg.mxu0
    %548 = vrot.lane.b32.xlu0 %v257, 96
    %v549 = vpop.permute.xlu0 %548
    %v552 = vsel %vm449, %v471, 0
    %554 = vmatprep.subr.mxu0 0.0
    %555 = vmatpush1.msra.mxu0 %v549
    %556 = vmatprep.subr.mxu0 0.0
    %557 = vmatpush1.msra.mxu0 0.0
    %558 = vmatprep.subr.mxu0 0.0
    %559 = vmatpush1.msra.mxu0 0.0
    %560 = vmatprep.subr.mxu0 0.0
    %561 = vmatpush1.msra.mxu0 0.0
    %562 = vmatprep.subr.mxu0 0.0
    %563 = vmatpush1.msra.mxu0 0.0
    %564 = vmatprep.subr.mxu0 0.0
    %565 = vmatpush1.msra.mxu0 0.0
    %566 = vmatprep.subr.mxu0 0.0
    %567 = vmatpush1.msra.mxu0 0.0
    %568 = vmatprep.subr.mxu0 0.0
    %569 = vmatpush1.msra.mxu0 0.0
    %570 = vmatprep.subr.mxu0 0.0
    %571 = vmatpush1.msra.mxu0 0.0
    %572 = vmatprep.subr.mxu0 0.0
    %573 = vmatpush1.msra.mxu0 0.0
    %574 = vmatprep.subr.mxu0 0.0
    %575 = vmatpush1.msra.mxu0 0.0
    %576 = vmatprep.subr.mxu0 0.0
    %577 = vmatpush1.msra.mxu0 0.0
    %578 = vmatprep.subr.mxu0 0.0
    %579 = vmatpush1.msra.mxu0 0.0
    %580 = vmatprep.subr.mxu0 0.0
    %581 = vmatpush1.msra.mxu0 0.0
    %582 = vmatprep.subr.mxu0 0.0
    %583 = vmatpush1.msra.mxu0 0.0
    %584 = vmatprep.subr.mxu0 0.0
    %585 = vmatpush1.msra.mxu0 0.0
    %586 = vmatprep.subr.mxu0 0.0
    %587 = vmatpush1.msra.mxu0 0.0
    %588 = vmatprep.subr.mxu0 0.0
    %589 = vmatpush1.msra.mxu0 0.0
    %590 = vmatprep.subr.mxu0 0.0
    %591 = vmatpush1.msra.mxu0 0.0
    %592 = vmatprep.subr.mxu0 0.0
    %593 = vmatpush1.msra.mxu0 0.0
    %594 = vmatprep.subr.mxu0 0.0
    %595 = vmatpush1.msra.mxu0 0.0
    %596 = vmatprep.subr.mxu0 0.0
    %597 = vmatpush1.msra.mxu0 0.0
    %598 = vmatprep.subr.mxu0 0.0
    %599 = vmatpush1.msra.mxu0 0.0
    %600 = vmatprep.subr.mxu0 0.0
    %601 = vmatpush1.msra.mxu0 0.0
    %602 = vmatprep.subr.mxu0 0.0
    %603 = vmatpush1.msra.mxu0 0.0
    %604 = vmatprep.subr.mxu0 0.0
    %605 = vmatpush1.msra.mxu0 0.0
    %606 = vmatprep.subr.mxu0 0.0
    %607 = vmatpush1.msra.mxu0 0.0
    %608 = vmatprep.subr.mxu0 0.0
    %609 = vmatpush1.msra.mxu0 0.0
    %610 = vmatprep.subr.mxu0 0.0
    %611 = vmatpush1.msra.mxu0 0.0
    %612 = vmatprep.subr.mxu0 0.0
    %613 = vmatpush1.msra.mxu0 0.0
    %614 = vmatprep.subr.mxu0 0.0
    %615 = vmatpush1.msra.mxu0 0.0
    %616 = vmatprep.subr.mxu0 0.0
    %617 = vmatpush1.msra.mxu0 0.0
    %618 = vmatprep.mubr.f32.mxu0 0.0
    %619 = vmatmul.mubr.f32.gmra.mrb[0].mxu0 %v552
    %v620 = vpop.f32.mrb[0].mxu0
    %v621 = vadd.f32 0.0, %v620
    %v622 = vpop.f32.mrb[0].mxu0
    %623 = vdwg.mxu0
    %v624 = vmul.f32 %v545, %v96
    %v625 = vmul.f32 %v621, %v96
    %v626 = vsel %vm101, %v624, 0.0
    %v627 = vrot.slane %v626, 4
    %v628 = vadd.f32 %v626, %v627
    %v629 = vrot.slane %v628, 2
    %v630 = vadd.f32 %v628, %v629
    %v631 = vrot.slane %v630, 1
    %v632 = vadd.f32 %v630, %v631
    %v633 = vsel %vm101, %v625, 0.0
    %v634 = vrot.slane %v633, 4
    %v635 = vadd.f32 %v633, %v634
    %v636 = vrot.slane %v635, 2
    %v637 = vadd.f32 %v635, %v636
    %v638 = vrot.slane %v637, 1
    %v639 = vadd.f32 %v637, %v638
    %v640 = vld [vmem:[#allocation10] sm:$0xff]
    %v641 = vld [vmem:[#allocation10 + $0x8] sm:$0xff]
    %v642 = vld [vmem:[#allocation10 + $0x10] sm:$0xff]
    %v643 = vld [vmem:[#allocation10 + $0x18] sm:$0xff]
    %v644 = vld [vmem:[%s5] sm:$0x1]
    %v646 = vlaneseq
    %v647 = vshrl.u32 %v646, 7
    %v648 = vsub.s32 0, %v647
    %v649 = vrot.slane %v644, %v648
    %vm653 = vcmask 1041409
    %v654 = vsel %vm653, %v639, %v632
    %v655 = vsel %vm101, %v654, 0
    %657 = vmatprep.subr.mxu0 0.0
    %658 = vmatpush1.msra.mxu0 %v640
    %659 = vmatprep.subr.mxu0 0.0
    %660 = vmatpush1.msra.mxu0 %v641
    %661 = vmatprep.subr.mxu0 0.0
    %662 = vmatpush1.msra.mxu0 %v642
    %663 = vmatprep.subr.mxu0 0.0
    %664 = vmatpush1.msra.mxu0 %v643
    %665 = vmatprep.subr.mxu0 0.0
    %666 = vmatpush1.msra.mxu0 0.0
    %667 = vmatprep.subr.mxu0 0.0
    %668 = vmatpush1.msra.mxu0 0.0
    %669 = vmatprep.subr.mxu0 0.0
    %670 = vmatpush1.msra.mxu0 0.0
    %671 = vmatprep.subr.mxu0 0.0
    %672 = vmatpush1.msra.mxu0 0.0
    %673 = vmatprep.subr.mxu0 0.0
    %674 = vmatpush1.msra.mxu0 0.0
    %675 = vmatprep.subr.mxu0 0.0
    %676 = vmatpush1.msra.mxu0 0.0
    %677 = vmatprep.subr.mxu0 0.0
    %678 = vmatpush1.msra.mxu0 0.0
    %679 = vmatprep.subr.mxu0 0.0
    %680 = vmatpush1.msra.mxu0 0.0
    %681 = vmatprep.subr.mxu0 0.0
    %682 = vmatpush1.msra.mxu0 0.0
    %683 = vmatprep.subr.mxu0 0.0
    %684 = vmatpush1.msra.mxu0 0.0
    %685 = vmatprep.subr.mxu0 0.0
    %686 = vmatpush1.msra.mxu0 0.0
    %687 = vmatprep.subr.mxu0 0.0
    %688 = vmatpush1.msra.mxu0 0.0
    %689 = vmatprep.subr.mxu0 0.0
    %690 = vmatpush1.msra.mxu0 0.0
    %691 = vmatprep.subr.mxu0 0.0
    %692 = vmatpush1.msra.mxu0 0.0
    %693 = vmatprep.subr.mxu0 0.0
    %694 = vmatpush1.msra.mxu0 0.0
    %695 = vmatprep.subr.mxu0 0.0
    %696 = vmatpush1.msra.mxu0 0.0
    %697 = vmatprep.subr.mxu0 0.0
    %698 = vmatpush1.msra.mxu0 0.0
    %699 = vmatprep.subr.mxu0 0.0
    %700 = vmatpush1.msra.mxu0 0.0
    %701 = vmatprep.subr.mxu0 0.0
    %702 = vmatpush1.msra.mxu0 0.0
    %703 = vmatprep.subr.mxu0 0.0
    %704 = vmatpush1.msra.mxu0 0.0
    %705 = vmatprep.subr.mxu0 0.0
    %706 = vmatpush1.msra.mxu0 0.0
    %707 = vmatprep.subr.mxu0 0.0
    %708 = vmatpush1.msra.mxu0 0.0
    %709 = vmatprep.subr.mxu0 0.0
    %710 = vmatpush1.msra.mxu0 0.0
    %711 = vmatprep.subr.mxu0 0.0
    %712 = vmatpush1.msra.mxu0 0.0
    %713 = vmatprep.subr.mxu0 0.0
    %714 = vmatpush1.msra.mxu0 0.0
    %715 = vmatprep.subr.mxu0 0.0
    %716 = vmatpush1.msra.mxu0 0.0
    %717 = vmatprep.subr.mxu0 0.0
    %718 = vmatpush1.msra.mxu0 0.0
    %719 = vmatprep.subr.mxu0 0.0
    %720 = vmatpush1.msra.mxu0 0.0
    %721 = vmatprep.mubr.f32.mxu0 0.0
    %722 = vmatmul.mubr.f32.gmra.mrb[0].mxu0 %v655
    %v723 = vpop.f32.mrb[0].mxu0
    %v724 = vadd.f32 %v649, %v723
    %v725 = vpop.f32.mrb[0].mxu0
    %726 = vdwg.mxu0
    %vm727 = vcmask 254976
    %728 = vst.msk [vmem:[#allocation11] sm:$0x3] %vm727, %v724
    // Predicated region
    $region50: #{tpu_custom_call.1} parent=1 // pred_check
      _
    $region51: #{tpu_custom_call.1} parent=1 // pred_check_branch
      %730 = sbr.rel (0) target = $region53
    $region52: #{tpu_custom_call.1} parent=1 // pred_region
      %s732 = ssub.s32 32, 32
      %733 = vsyncadd [#allocation4], %s732
      %s735 = sshll.u32 [#allocation11], 4
      %s736 = int_to_ptr.vmem [resolvable:$true] %s735
      %738 = dma.vmem_to_hbm [thread:$0]  %s736, 32, %s7, [#allocation4]
    $region53: #{tpu_custom_call.1} parent=1 // pred_fallthru
      _
    // Predicated region
    $region54: #{tpu_custom_call.1} parent=1 // pred_check
      _
    $region55: #{tpu_custom_call.1} parent=1 // pred_check_branch
      %740 = sbr.rel (0) target = $region57
    $region56: #{tpu_custom_call.1} parent=1 // pred_region
      %741 = dma.done [#allocation4], 32
    $region57: #{tpu_custom_call.1} parent=1 // pred_fallthru
      _
    %742 = vsyncpa [#allocation3], 1
    %743 = vsyncpa [#allocation6], 1
    %744 = vsyncpa [#allocation9], 1
    %745 = vsyncpa [#allocation4], 1

// kernel: tpu_custom_call.1
$region0: #{tpu_custom_call.1}
  #allocation0 [shape = 'u32[]', space=smem, size = 0x4, offset = 0x4, fixed_abs, tag = 'smem constant byte address 0x4 - core index']
  #allocation1 [shape = 'u32[144,128]{1,0:T(1,128)}', space=vmem, size = 0x12000, scoped, tag = 'internal scratch']
  %s0 = inlined_call_operand.hbm [shape: f32[1,2,32], index: 0, kind: input, shape index: {}]
  %s1 = inlined_call_operand.hbm [shape: f32[2,8,32], index: 1, kind: input, shape index: {}]
  %s2 = inlined_call_operand.hbm [shape: f32[32,32], index: 2, kind: input, shape index: {}]
  %s3 = inlined_call_operand.hbm [shape: f32[32,64], index: 3, kind: input, shape index: {}]
  %s4 = inlined_call_operand.hbm [shape: f32[32,32], index: 4, kind: input, shape index: {}]
  %s5 = inlined_call_operand.vmem [shape: f32[1,32], index: 5, kind: input, shape index: {}]
  %s6 = inlined_call_operand.vmem [shape: f32[8,32], index: 6, kind: input, shape index: {}]
  %s7 = inlined_call_operand.hbm [shape: f32[1,2,32], index: 7, kind: output, shape index: {}]
  %s8 = sld [smem:[#allocation0]]
  $region58: #{tpu_custom_call.1} parent=0
    _
  %s10 = ssub.s32 1, %s8
  %s11 = scalar_select 0, %s10, %s8
  $region1: #{tpu_custom_call.1} parent=0
    #allocation2 [shape = 'u8[1024]{0}', space=vmem, size = 0x400, scoped, tag = 'input window, operand 0, single buffered']
    #allocation3 [shape = 's32[1]{0}', space=sflag, size = 0x4, scoped, tag = 'scoped memory for tpu_custom_call.1']
    #allocation4 [shape = 's32[1]{0}', space=sflag, size = 0x4, scoped, tag = 'scoped memory for tpu_custom_call.1']
    #allocation5 [shape = 'u8[8192]{0}', space=vmem, size = 0x2000, scoped, tag = 'input window, operand 1, single buffered']
    #allocation6 [shape = 's32[1]{0}', space=sflag, size = 0x4, scoped, tag = 'scoped memory for tpu_custom_call.1']
    #allocation7 [shape = 'u8[16384]{0}', space=vmem, size = 0x4000, scoped, tag = 'input window, operand 2, single buffered']
    #allocation8 [shape = 'u8[16384]{0}', space=vmem, size = 0x4000, scoped, tag = 'input window, operand 3, single buffered']
    #allocation9 [shape = 's32[1]{0}', space=sflag, size = 0x4, scoped, tag = 'scoped memory for tpu_custom_call.1']
    #allocation10 [shape = 'u8[16384]{0}', space=vmem, size = 0x4000, scoped, tag = 'input window, operand 4, single buffered']
    #allocation11 [shape = 'u8[1024]{0}', space=vmem, size = 0x400, scoped, tag = 'output window, operand 0, single buffered']
    %12 = vsyncpa [#allocation3], 0
    %13 = vsyncpa [#allocation6], 0
    %14 = vsyncpa [#allocation9], 0
    %15 = vsyncpa [#allocation4], 0
    // Predicated region
    $region2: #{tpu_custom_call.1} parent=1 // pred_check
      _
    $region3: #{tpu_custom_call.1} parent=1 // pred_check_branch
      %17 = sbr.rel (0) target = $region5
    $region4: #{tpu_custom_call.1} parent=1 // pred_region
      %s19 = ssub.s32 32, 32
      %20 = vsyncadd [#allocation3], %s19
      %s22 = sshll.u32 [#allocation2], 4
      %s23 = int_to_ptr.vmem [resolvable:$true] %s22
      %25 = dma.hbm_to_vmem [thread:$0]  %s0, 32, %s23, [#allocation3]
    $region5: #{tpu_custom_call.1} parent=1 // pred_fallthru
      _
    // Predicated region
    $region6: #{tpu_custom_call.1} parent=1 // pred_check
      _
    $region7: #{tpu_custom_call.1} parent=1 // pred_check_branch
      %27 = sbr.rel (0) target = $region9
    $region8: #{tpu_custom_call.1} parent=1 // pred_region
      %s29 = ssub.s32 256, 256
      %30 = vsyncadd [#allocation6], %s29
      %s31 = sshll.u32 [#allocation5], 4
      %s32 = int_to_ptr.vmem [resolvable:$true] %s31
      %37 = dma.hbm_to_vmem [thread:$0]  %s1, 256, %s32, [#allocation6], 128, 128, 8
    $region9: #{tpu_custom_call.1} parent=1 // pred_fallthru
      _
    // Predicated region
    $region10: #{tpu_custom_call.1} parent=1 // pred_check
      _
    $region11: #{tpu_custom_call.1} parent=1 // pred_check_branch
      %39 = sbr.rel (0) target = $region13
    $region12: #{tpu_custom_call.1} parent=1 // pred_region
      %s41 = ssub.s32 512, 512
      %42 = vsyncadd [#allocation6], %s41
      %s43 = sshll.u32 [#allocation7], 4
      %s44 = int_to_ptr.vmem [resolvable:$true] %s43
      %49 = dma.hbm_to_vmem [thread:$0]  %s2, 512, %s44, [#allocation6], 128, 128, 8
    $region13: #{tpu_custom_call.1} parent=1 // pred_fallthru
      _
    // Predicated region
    $region14: #{tpu_custom_call.1} parent=1 // pred_check
      _
    $region15: #{tpu_custom_call.1} parent=1 // pred_check_branch
      %51 = sbr.rel (0) target = $region17
    $region16: #{tpu_custom_call.1} parent=1 // pred_region
      %s53 = ssub.s32 512, 512
      %54 = vsyncadd [#allocation9], %s53
      %s55 = sshll.u32 [#allocation8], 4
      %s56 = int_to_ptr.vmem [resolvable:$true] %s55
      %61 = dma.hbm_to_vmem [thread:$0]  %s3, 512, %s56, [#allocation9], 128, 128, 8
    $region17: #{tpu_custom_call.1} parent=1 // pred_fallthru
      _
    // Predicated region
    $region18: #{tpu_custom_call.1} parent=1 // pred_check
      _
    $region19: #{tpu_custom_call.1} parent=1 // pred_check_branch
      %63 = sbr.rel (0) target = $region21
    $region20: #{tpu_custom_call.1} parent=1 // pred_region
      %s65 = ssub.s32 512, 512
      %66 = vsyncadd [#allocation9], %s65
      %s67 = sshll.u32 [#allocation10], 4
      %s68 = int_to_ptr.vmem [resolvable:$true] %s67
      %73 = dma.hbm_to_vmem [thread:$0]  %s4, 512, %s68, [#allocation9], 128, 128, 8
    $region21: #{tpu_custom_call.1} parent=1 // pred_fallthru
      _
    // Predicated region
    $region22: #{tpu_custom_call.1} parent=1 // pred_check
      _
    $region23: #{tpu_custom_call.1} parent=1 // pred_check_branch
      %75 = sbr.rel (0) target = $region25
    $region24: #{tpu_custom_call.1} parent=1 // pred_region
      _
    $region25: #{tpu_custom_call.1} parent=1 // pred_fallthru
      _
    // Predicated region
    $region26: #{tpu_custom_call.1} parent=1 // pred_check
      _
    $region27: #{tpu_custom_call.1} parent=1 // pred_check_branch
      %77 = sbr.rel (0) target = $region29
    $region28: #{tpu_custom_call.1} parent=1 // pred_region
      _
    $region29: #{tpu_custom_call.1} parent=1 // pred_fallthru
      _
    // Predicated region
    $region30: #{tpu_custom_call.1} parent=1 // pred_check
      _
    $region31: #{tpu_custom_call.1} parent=1 // pred_check_branch
      %79 = sbr.rel (0) target = $region33
    $region32: #{tpu_custom_call.1} parent=1 // pred_region
      %80 = dma.done [#allocation3], 32
    $region33: #{tpu_custom_call.1} parent=1 // pred_fallthru
      _
    // Predicated region
    $region34: #{tpu_custom_call.1} parent=1 // pred_check
      _
    $region35: #{tpu_custom_call.1} parent=1 // pred_check_branch
      %82 = sbr.rel (0) target = $region37
    $region36: #{tpu_custom_call.1} parent=1 // pred_region
      %83 = dma.done [#allocation6], 256
    $region37: #{tpu_custom_call.1} parent=1 // pred_fallthru
      _
    // Predicated region
    $region38: #{tpu_custom_call.1} parent=1 // pred_check
      _
    $region39: #{tpu_custom_call.1} parent=1 // pred_check_branch
      %85 = sbr.rel (0) target = $region41
    $region40: #{tpu_custom_call.1} parent=1 // pred_region
      %86 = dma.done [#allocation6], 512
    $region41: #{tpu_custom_call.1} parent=1 // pred_fallthru
      _
    // Predicated region
    $region42: #{tpu_custom_call.1} parent=1 // pred_check
      _
    $region43: #{tpu_custom_call.1} parent=1 // pred_check_branch
      %88 = sbr.rel (0) target = $region45
    $region44: #{tpu_custom_call.1} parent=1 // pred_region
      %89 = dma.done [#allocation9], 512
    $region45: #{tpu_custom_call.1} parent=1 // pred_fallthru
      _
    // Predicated region
    $region46: #{tpu_custom_call.1} parent=1 // pred_check
      _
    $region47: #{tpu_custom_call.1} parent=1 // pred_check_branch
      %91 = sbr.rel (0) target = $region49
    $region48: #{tpu_custom_call.1} parent=1 // pred_region
      %92 = dma.done [#allocation9], 512
    $region49: #{tpu_custom_call.1} parent=1 // pred_fallthru
      _
    %v93 = vld [vmem:[#allocation2] sm:$0x3]
    %v94 = vld [vmem:[#allocation5] sm:$0xff]
    %v95 = vld [vmem:[#allocation5 + $0x8] sm:$0xff]
    %v96 = vld [vmem:[%s6] sm:$0xff]
    %v97 = vld [vmem:[#allocation7] sm:$0xff]
    %v98 = vld [vmem:[#allocation7 + $0x8] sm:$0xff]
    %v99 = vld [vmem:[#allocation7 + $0x10] sm:$0xff]
    %v100 = vld [vmem:[#allocation7 + $0x18] sm:$0xff]
    %vm101 = vcmask 261120
    %v103 = vsel %vm101, %v93, 0
    %105 = vmatprep.subr.mxu0 0.0
    %106 = vmatpush1.msra.mxu0 %v97
    %107 = vmatprep.subr.mxu0 0.0
    %108 = vmatpush1.msra.mxu0 %v98
    %109 = vmatprep.subr.mxu0 0.0
    %110 = vmatpush1.msra.mxu0 %v99
    %111 = vmatprep.subr.mxu0 0.0
    %112 = vmatpush1.msra.mxu0 %v100
    %113 = vmatprep.subr.mxu0 0.0
    %114 = vmatpush1.msra.mxu0 0.0
    %115 = vmatprep.subr.mxu0 0.0
    %116 = vmatpush1.msra.mxu0 0.0
    %117 = vmatprep.subr.mxu0 0.0
    %118 = vmatpush1.msra.mxu0 0.0
    %119 = vmatprep.subr.mxu0 0.0
    %120 = vmatpush1.msra.mxu0 0.0
    %121 = vmatprep.subr.mxu0 0.0
    %122 = vmatpush1.msra.mxu0 0.0
    %123 = vmatprep.subr.mxu0 0.0
    %124 = vmatpush1.msra.mxu0 0.0
    %125 = vmatprep.subr.mxu0 0.0
    %126 = vmatpush1.msra.mxu0 0.0
    %127 = vmatprep.subr.mxu0 0.0
    %128 = vmatpush1.msra.mxu0 0.0
    %129 = vmatprep.subr.mxu0 0.0
    %130 = vmatpush1.msra.mxu0 0.0
    %131 = vmatprep.subr.mxu0 0.0
    %132 = vmatpush1.msra.mxu0 0.0
    %133 = vmatprep.subr.mxu0 0.0
    %134 = vmatpush1.msra.mxu0 0.0
    %135 = vmatprep.subr.mxu0 0.0
    %136 = vmatpush1.msra.mxu0 0.0
    %137 = vmatprep.subr.mxu0 0.0
    %138 = vmatpush1.msra.mxu0 0.0
    %139 = vmatprep.subr.mxu0 0.0
    %140 = vmatpush1.msra.mxu0 0.0
    %141 = vmatprep.subr.mxu0 0.0
    %142 = vmatpush1.msra.mxu0 0.0
    %143 = vmatprep.subr.mxu0 0.0
    %144 = vmatpush1.msra.mxu0 0.0
    %145 = vmatprep.subr.mxu0 0.0
    %146 = vmatpush1.msra.mxu0 0.0
    %147 = vmatprep.subr.mxu0 0.0
    %148 = vmatpush1.msra.mxu0 0.0
    %149 = vmatprep.subr.mxu0 0.0
    %150 = vmatpush1.msra.mxu0 0.0
    %151 = vmatprep.subr.mxu0 0.0
    %152 = vmatpush1.msra.mxu0 0.0
    %153 = vmatprep.subr.mxu0 0.0
    %154 = vmatpush1.msra.mxu0 0.0
    %155 = vmatprep.subr.mxu0 0.0
    %156 = vmatpush1.msra.mxu0 0.0
    %157 = vmatprep.subr.mxu0 0.0
    %158 = vmatpush1.msra.mxu0 0.0
    %159 = vmatprep.subr.mxu0 0.0
    %160 = vmatpush1.msra.mxu0 0.0
    %161 = vmatprep.subr.mxu0 0.0
    %162 = vmatpush1.msra.mxu0 0.0
    %163 = vmatprep.subr.mxu0 0.0
    %164 = vmatpush1.msra.mxu0 0.0
    %165 = vmatprep.subr.mxu0 0.0
    %166 = vmatpush1.msra.mxu0 0.0
    %167 = vmatprep.subr.mxu0 0.0
    %168 = vmatpush1.msra.mxu0 0.0
    %169 = vmatprep.mubr.f32.mxu0 0.0
    %170 = vmatmul.mubr.f32.gmra.mrb[0].mxu0 %v103
    %v171 = vpop.f32.mrb[0].mxu0
    %v172 = vadd.f32 0.0, %v171
    %v173 = vpop.f32.mrb[0].mxu0
    %174 = vdwg.mxu0
    %v175 = vld [vmem:[#allocation8] sm:$0xff]
    %v176 = vld [vmem:[#allocation8 + $0x8] sm:$0xff]
    %v177 = vld [vmem:[#allocation8 + $0x10] sm:$0xff]
    %v178 = vld [vmem:[#allocation8 + $0x18] sm:$0xff]
    %v180 = vsel %vm101, %v94, 0
    %v183 = vsel %vm101, %v95, 0
    %185 = vmatprep.subr.mxu0 0.0
    %186 = vmatpush1.msra.mxu0 %v175
    %187 = vmatprep.subr.mxu0 0.0
    %188 = vmatpush1.msra.mxu0 %v176
    %189 = vmatprep.subr.mxu0 0.0
    %190 = vmatpush1.msra.mxu0 %v177
    %191 = vmatprep.subr.mxu0 0.0
    %192 = vmatpush1.msra.mxu0 %v178
    %193 = vmatprep.subr.mxu0 0.0
    %194 = vmatpush1.msra.mxu0 0.0
    %195 = vmatprep.subr.mxu0 0.0
    %196 = vmatpush1.msra.mxu0 0.0
    %197 = vmatprep.subr.mxu0 0.0
    %198 = vmatpush1.msra.mxu0 0.0
    %199 = vmatprep.subr.mxu0 0.0
    %200 = vmatpush1.msra.mxu0 0.0
    %201 = vmatprep.subr.mxu0 0.0
    %202 = vmatpush1.msra.mxu0 0.0
    %203 = vmatprep.subr.mxu0 0.0
    %204 = vmatpush1.msra.mxu0 0.0
    %205 = vmatprep.subr.mxu0 0.0
    %206 = vmatpush1.msra.mxu0 0.0
    %207 = vmatprep.subr.mxu0 0.0
    %208 = vmatpush1.msra.mxu0 0.0
    %209 = vmatprep.subr.mxu0 0.0
    %210 = vmatpush1.msra.mxu0 0.0
    %211 = vmatprep.subr.mxu0 0.0
    %212 = vmatpush1.msra.mxu0 0.0
    %213 = vmatprep.subr.mxu0 0.0
    %214 = vmatpush1.msra.mxu0 0.0
    %215 = vmatprep.subr.mxu0 0.0
    %216 = vmatpush1.msra.mxu0 0.0
    %217 = vmatprep.subr.mxu0 0.0
    %218 = vmatpush1.msra.mxu0 0.0
    %219 = vmatprep.subr.mxu0 0.0
    %220 = vmatpush1.msra.mxu0 0.0
    %221 = vmatprep.subr.mxu0 0.0
    %222 = vmatpush1.msra.mxu0 0.0
    %223 = vmatprep.subr.mxu0 0.0
    %224 = vmatpush1.msra.mxu0 0.0
    %225 = vmatprep.subr.mxu0 0.0
    %226 = vmatpush1.msra.mxu0 0.0
    %227 = vmatprep.subr.mxu0 0.0
    %228 = vmatpush1.msra.mxu0 0.0
    %229 = vmatprep.subr.mxu0 0.0
    %230 = vmatpush1.msra.mxu0 0.0
    %231 = vmatprep.subr.mxu0 0.0
    %232 = vmatpush1.msra.mxu0 0.0
    %233 = vmatprep.subr.mxu0 0.0
    %234 = vmatpush1.msra.mxu0 0.0
    %235 = vmatprep.subr.mxu0 0.0
    %236 = vmatpush1.msra.mxu0 0.0
    %237 = vmatprep.subr.mxu0 0.0
    %238 = vmatpush1.msra.mxu0 0.0
    %239 = vmatprep.subr.mxu0 0.0
    %240 = vmatpush1.msra.mxu0 0.0
    %241 = vmatprep.subr.mxu0 0.0
    %242 = vmatpush1.msra.mxu0 0.0
    %243 = vmatprep.subr.mxu0 0.0
    %244 = vmatpush1.msra.mxu0 0.0
    %245 = vmatprep.subr.mxu0 0.0
    %246 = vmatpush1.msra.mxu0 0.0
    %247 = vmatprep.subr.mxu0 0.0
    %248 = vmatpush1.msra.mxu0 0.0
    %249 = vmatprep.mubr.f32.mxu0 0.0
    %250 = vmatmul.mubr.f32.gmra.mrb[0].mxu0 %v180
    %v251 = vpop.f32.mrb[0].mxu0
    %v252 = vadd.f32 0.0, %v251
    %v253 = vpop.f32.mrb[0].mxu0
    %254 = vmatprep.mubr.f32.mxu0 0.0
    %255 = vmatmul.mubr.f32.gmra.mrb[0].mxu0 %v183
    %v256 = vpop.f32.mrb[0].mxu0
    %v257 = vadd.f32 0.0, %v256
    %v258 = vpop.f32.mrb[0].mxu0
    %259 = vdwg.mxu0
    %v262 = vunpack.c.l.s4 1966171168
    %v263 = vunpack.c.0.s8 %v262
    %v264 = vlaneseq
    %v265 = vshrl.u32 %v264, 7
    %v266 = vsub.s32 %v263, %v265
    %v267 = vrot.slane %v172, %v266
    %v268 = vcombine.high %v267, %v267
    %v270 = vunpack.c.l.s4 1966171168
    %v271 = vunpack.c.0.s8 %v270
    %v272 = vlaneseq
    %v273 = vshrl.u32 %v272, 7
    %v274 = vsub.s32 %v271, %v273
    %v275 = vrot.slane %v267, %v274
    %v277 = vunpack.c.l.s4 1966171168
    %v278 = vunpack.c.0.s8 %v277
    %v279 = vlaneseq
    %v280 = vshrl.u32 %v279, 7
    %v281 = vsub.s32 %v278, %v280
    %v282 = vrot.slane %v268, %v281
    %v283 = vlaneseq
    %v284 = vshrl.u32 %v283, 7
    %v285 = vsub.s32 0, %v284
    %v286 = vrot.slane %v275, %v285
    %v287 = vlaneseq
    %v288 = vshrl.u32 %v287, 7
    %v289 = vsub.s32 0, %v288
    %v290 = vrot.slane %v282, %v289
    %v293 = vmul.f32 %v286, %v96
    %v294 = vmul.f32 %v290, %v96
    %v296 = vsel %vm101, %v293, 0
    %v299 = vsel %vm101, %v252, 0
    %301 = vmatprep.subr.mxu0 0.0
    %302 = vmatpush1.xpose.msra.mxu0 %v299
    %303 = vmatprep.subr.mxu0 0.0
    %304 = vmatpush1.xpose.msra.mxu0 0.0
    %305 = vmatprep.subr.mxu0 0.0
    %306 = vmatpush1.xpose.msra.mxu0 0.0
    %307 = vmatprep.subr.mxu0 0.0
    %308 = vmatpush1.xpose.msra.mxu0 0.0
    %309 = vmatprep.subr.mxu0 0.0
    %310 = vmatpush1.xpose.msra.mxu0 0.0
    %311 = vmatprep.subr.mxu0 0.0
    %312 = vmatpush1.xpose.msra.mxu0 0.0
    %313 = vmatprep.subr.mxu0 0.0
    %314 = vmatpush1.xpose.msra.mxu0 0.0
    %315 = vmatprep.subr.mxu0 0.0
    %316 = vmatpush1.xpose.msra.mxu0 0.0
    %317 = vmatprep.subr.mxu0 0.0
    %318 = vmatpush1.xpose.msra.mxu0 0.0
    %319 = vmatprep.subr.mxu0 0.0
    %320 = vmatpush1.xpose.msra.mxu0 0.0
    %321 = vmatprep.subr.mxu0 0.0
    %322 = vmatpush1.xpose.msra.mxu0 0.0
    %323 = vmatprep.subr.mxu0 0.0
    %324 = vmatpush1.xpose.msra.mxu0 0.0
    %325 = vmatprep.subr.mxu0 0.0
    %326 = vmatpush1.xpose.msra.mxu0 0.0
    %327 = vmatprep.subr.mxu0 0.0
    %328 = vmatpush1.xpose.msra.mxu0 0.0
    %329 = vmatprep.subr.mxu0 0.0
    %330 = vmatpush1.xpose.msra.mxu0 0.0
    %331 = vmatprep.subr.mxu0 0.0
    %332 = vmatpush1.xpose.msra.mxu0 0.0
    %333 = vmatprep.subr.mxu0 0.0
    %334 = vmatpush1.xpose.msra.mxu0 0.0
    %335 = vmatprep.subr.mxu0 0.0
    %336 = vmatpush1.xpose.msra.mxu0 0.0
    %337 = vmatprep.subr.mxu0 0.0
    %338 = vmatpush1.xpose.msra.mxu0 0.0
    %339 = vmatprep.subr.mxu0 0.0
    %340 = vmatpush1.xpose.msra.mxu0 0.0
    %341 = vmatprep.subr.mxu0 0.0
    %342 = vmatpush1.xpose.msra.mxu0 0.0
    %343 = vmatprep.subr.mxu0 0.0
    %344 = vmatpush1.xpose.msra.mxu0 0.0
    %345 = vmatprep.subr.mxu0 0.0
    %346 = vmatpush1.xpose.msra.mxu0 0.0
    %347 = vmatprep.subr.mxu0 0.0
    %348 = vmatpush1.xpose.msra.mxu0 0.0
    %349 = vmatprep.subr.mxu0 0.0
    %350 = vmatpush1.xpose.msra.mxu0 0.0
    %351 = vmatprep.subr.mxu0 0.0
    %352 = vmatpush1.xpose.msra.mxu0 0.0
    %353 = vmatprep.subr.mxu0 0.0
    %354 = vmatpush1.xpose.msra.mxu0 0.0
    %355 = vmatprep.subr.mxu0 0.0
    %356 = vmatpush1.xpose.msra.mxu0 0.0
    %357 = vmatprep.subr.mxu0 0.0
    %358 = vmatpush1.xpose.msra.mxu0 0.0
    %359 = vmatprep.subr.mxu0 0.0
    %360 = vmatpush1.xpose.msra.mxu0 0.0
    %361 = vmatprep.subr.mxu0 0.0
    %362 = vmatpush1.xpose.msra.mxu0 0.0
    %363 = vmatprep.subr.mxu0 0.0
    %364 = vmatpush1.xpose.msra.mxu0 0.0
    %365 = vmatprep.mubr.f32.mxu0 0.0
    %366 = vmatmul.mubr.f32.gmra.mrb[0].mxu0 %v296
    %v367 = vpop.f32.mrb[0].mxu0
    %v368 = vadd.f32 0.0, %v367
    %v369 = vpop.f32.mrb[0].mxu0
    %370 = vdwg.mxu0
    %v372 = vsel %vm101, %v294, 0
    %v375 = vsel %vm101, %v257, 0
    %377 = vmatprep.subr.mxu0 0.0
    %378 = vmatpush1.xpose.msra.mxu0 %v375
    %379 = vmatprep.subr.mxu0 0.0
    %380 = vmatpush1.xpose.msra.mxu0 0.0
    %381 = vmatprep.subr.mxu0 0.0
    %382 = vmatpush1.xpose.msra.mxu0 0.0
    %383 = vmatprep.subr.mxu0 0.0
    %384 = vmatpush1.xpose.msra.mxu0 0.0
    %385 = vmatprep.subr.mxu0 0.0
    %386 = vmatpush1.xpose.msra.mxu0 0.0
    %387 = vmatprep.subr.mxu0 0.0
    %388 = vmatpush1.xpose.msra.mxu0 0.0
    %389 = vmatprep.subr.mxu0 0.0
    %390 = vmatpush1.xpose.msra.mxu0 0.0
    %391 = vmatprep.subr.mxu0 0.0
    %392 = vmatpush1.xpose.msra.mxu0 0.0
    %393 = vmatprep.subr.mxu0 0.0
    %394 = vmatpush1.xpose.msra.mxu0 0.0
    %395 = vmatprep.subr.mxu0 0.0
    %396 = vmatpush1.xpose.msra.mxu0 0.0
    %397 = vmatprep.subr.mxu0 0.0
    %398 = vmatpush1.xpose.msra.mxu0 0.0
    %399 = vmatprep.subr.mxu0 0.0
    %400 = vmatpush1.xpose.msra.mxu0 0.0
    %401 = vmatprep.subr.mxu0 0.0
    %402 = vmatpush1.xpose.msra.mxu0 0.0
    %403 = vmatprep.subr.mxu0 0.0
    %404 = vmatpush1.xpose.msra.mxu0 0.0
    %405 = vmatprep.subr.mxu0 0.0
    %406 = vmatpush1.xpose.msra.mxu0 0.0
    %407 = vmatprep.subr.mxu0 0.0
    %408 = vmatpush1.xpose.msra.mxu0 0.0
    %409 = vmatprep.subr.mxu0 0.0
    %410 = vmatpush1.xpose.msra.mxu0 0.0
    %411 = vmatprep.subr.mxu0 0.0
    %412 = vmatpush1.xpose.msra.mxu0 0.0
    %413 = vmatprep.subr.mxu0 0.0
    %414 = vmatpush1.xpose.msra.mxu0 0.0
    %415 = vmatprep.subr.mxu0 0.0
    %416 = vmatpush1.xpose.msra.mxu0 0.0
    %417 = vmatprep.subr.mxu0 0.0
    %418 = vmatpush1.xpose.msra.mxu0 0.0
    %419 = vmatprep.subr.mxu0 0.0
    %420 = vmatpush1.xpose.msra.mxu0 0.0
    %421 = vmatprep.subr.mxu0 0.0
    %422 = vmatpush1.xpose.msra.mxu0 0.0
    %423 = vmatprep.subr.mxu0 0.0
    %424 = vmatpush1.xpose.msra.mxu0 0.0
    %425 = vmatprep.subr.mxu0 0.0
    %426 = vmatpush1.xpose.msra.mxu0 0.0
    %427 = vmatprep.subr.mxu0 0.0
    %428 = vmatpush1.xpose.msra.mxu0 0.0
    %429 = vmatprep.subr.mxu0 0.0
    %430 = vmatpush1.xpose.msra.mxu0 0.0
    %431 = vmatprep.subr.mxu0 0.0
    %432 = vmatpush1.xpose.msra.mxu0 0.0
    %433 = vmatprep.subr.mxu0 0.0
    %434 = vmatpush1.xpose.msra.mxu0 0.0
    %435 = vmatprep.subr.mxu0 0.0
    %436 = vmatpush1.xpose.msra.mxu0 0.0
    %437 = vmatprep.subr.mxu0 0.0
    %438 = vmatpush1.xpose.msra.mxu0 0.0
    %439 = vmatprep.subr.mxu0 0.0
    %440 = vmatpush1.xpose.msra.mxu0 0.0
    %441 = vmatprep.mubr.f32.mxu0 0.0
    %442 = vmatmul.mubr.f32.gmra.mrb[0].mxu0 %v372
    %v443 = vpop.f32.mrb[0].mxu0
    %v444 = vadd.f32 0.0, %v443
    %v445 = vpop.f32.mrb[0].mxu0
    %446 = vdwg.mxu0
    %v447 = vmul.f32 %v368, 0.5
    %v448 = vmul.f32 %v444, 0.5
    %vm449 = vcmask 64512
    %v450 = vsel %vm449, %v447, -inf
    %451 = vmax.xlane.f32.xlu0 %v450
    %v452 = vpop.xlane.xlu0 %451
    %v453 = vsel %vm449, %v448, -inf
    %454 = vmax.xlane.f32.xlu0 %v453
    %v455 = vpop.xlane.xlu0 %454
    %v456 = vsub.f32 %v447, %v452
    %v457 = vsub.f32 %v448, %v455
    %v458 = vmul.f32 %v456, 1.442695
    %v459 = vpow.pop %v458
    %v460 = vmul.f32 %v457, 1.442695
    %v461 = vpow.pop %v460
    %v462 = vsel %vm449, %v459, 0.0
    %463 = vadd.xlane.f32.xlu0 %v462
    %v464 = vpop.xlane.xlu0 %463
    %v465 = vsel %vm449, %v461, 0.0
    %466 = vadd.xlane.f32.xlu0 %v465
    %v467 = vpop.xlane.xlu0 %466
    %v468 = vrcp.pop %v464
    %v469 = vmul.f32 %v459, %v468
    %v470 = vrcp.pop %v467
    %v471 = vmul.f32 %v461, %v470
    %472 = vrot.lane.b32.xlu0 %v252, 96
    %v473 = vpop.permute.xlu0 %472
    %v476 = vsel %vm449, %v469, 0
    %478 = vmatprep.subr.mxu0 0.0
    %479 = vmatpush1.msra.mxu0 %v473
    %480 = vmatprep.subr.mxu0 0.0
    %481 = vmatpush1.msra.mxu0 0.0
    %482 = vmatprep.subr.mxu0 0.0
    %483 = vmatpush1.msra.mxu0 0.0
    %484 = vmatprep.subr.mxu0 0.0
    %485 = vmatpush1.msra.mxu0 0.0
    %486 = vmatprep.subr.mxu0 0.0
    %487 = vmatpush1.msra.mxu0 0.0
    %488 = vmatprep.subr.mxu0 0.0
    %489 = vmatpush1.msra.mxu0 0.0
    %490 = vmatprep.subr.mxu0 0.0
    %491 = vmatpush1.msra.mxu0 0.0
    %492 = vmatprep.subr.mxu0 0.0
    %493 = vmatpush1.msra.mxu0 0.0
    %494 = vmatprep.subr.mxu0 0.0
    %495 = vmatpush1.msra.mxu0 0.0
    %496 = vmatprep.subr.mxu0 0.0
    %497 = vmatpush1.msra.mxu0 0.0
    %498 = vmatprep.subr.mxu0 0.0
    %499 = vmatpush1.msra.mxu0 0.0
    %500 = vmatprep.subr.mxu0 0.0
    %501 = vmatpush1.msra.mxu0 0.0
    %502 = vmatprep.subr.mxu0 0.0
    %503 = vmatpush1.msra.mxu0 0.0
    %504 = vmatprep.subr.mxu0 0.0
    %505 = vmatpush1.msra.mxu0 0.0
    %506 = vmatprep.subr.mxu0 0.0
    %507 = vmatpush1.msra.mxu0 0.0
    %508 = vmatprep.subr.mxu0 0.0
    %509 = vmatpush1.msra.mxu0 0.0
    %510 = vmatprep.subr.mxu0 0.0
    %511 = vmatpush1.msra.mxu0 0.0
    %512 = vmatprep.subr.mxu0 0.0
    %513 = vmatpush1.msra.mxu0 0.0
    %514 = vmatprep.subr.mxu0 0.0
    %515 = vmatpush1.msra.mxu0 0.0
    %516 = vmatprep.subr.mxu0 0.0
    %517 = vmatpush1.msra.mxu0 0.0
    %518 = vmatprep.subr.mxu0 0.0
    %519 = vmatpush1.msra.mxu0 0.0
    %520 = vmatprep.subr.mxu0 0.0
    %521 = vmatpush1.msra.mxu0 0.0
    %522 = vmatprep.subr.mxu0 0.0
    %523 = vmatpush1.msra.mxu0 0.0
    %524 = vmatprep.subr.mxu0 0.0
    %525 = vmatpush1.msra.mxu0 0.0
    %526 = vmatprep.subr.mxu0 0.0
    %527 = vmatpush1.msra.mxu0 0.0
    %528 = vmatprep.subr.mxu0 0.0
    %529 = vmatpush1.msra.mxu0 0.0
    %530 = vmatprep.subr.mxu0 0.0
    %531 = vmatpush1.msra.mxu0 0.0
    %532 = vmatprep.subr.mxu0 0.0
    %533 = vmatpush1.msra.mxu0 0.0
    %534 = vmatprep.subr.mxu0 0.0
    %535 = vmatpush1.msra.mxu0 0.0
    %536 = vmatprep.subr.mxu0 0.0
    %537 = vmatpush1.msra.mxu0 0.0
    %538 = vmatprep.subr.mxu0 0.0
    %539 = vmatpush1.msra.mxu0 0.0
    %540 = vmatprep.subr.mxu0 0.0
    %541 = vmatpush1.msra.mxu0 0.0
    %542 = vmatprep.mubr.f32.mxu0 0.0
    %543 = vmatmul.mubr.f32.gmra.mrb[0].mxu0 %v476
    %v544 = vpop.f32.mrb[0].mxu0
    %v545 = vadd.f32 0.0, %v544
    %v546 = vpop.f32.mrb[0].mxu0
    %547 = vdwg.mxu0
    %548 = vrot.lane.b32.xlu0 %v257, 96
    %v549 = vpop.permute.xlu0 %548
    %v552 = vsel %vm449, %v471, 0
    %554 = vmatprep.subr.mxu0 0.0
    %555 = vmatpush1.msra.mxu0 %v549
    %556 = vmatprep.subr.mxu0 0.0
    %557 = vmatpush1.msra.mxu0 0.0
    %558 = vmatprep.subr.mxu0 0.0
    %559 = vmatpush1.msra.mxu0 0.0
    %560 = vmatprep.subr.mxu0 0.0
    %561 = vmatpush1.msra.mxu0 0.0
    %562 = vmatprep.subr.mxu0 0.0
    %563 = vmatpush1.msra.mxu0 0.0
    %564 = vmatprep.subr.mxu0 0.0
    %565 = vmatpush1.msra.mxu0 0.0
    %566 = vmatprep.subr.mxu0 0.0
    %567 = vmatpush1.msra.mxu0 0.0
    %568 = vmatprep.subr.mxu0 0.0
    %569 = vmatpush1.msra.mxu0 0.0
    %570 = vmatprep.subr.mxu0 0.0
    %571 = vmatpush1.msra.mxu0 0.0
    %572 = vmatprep.subr.mxu0 0.0
    %573 = vmatpush1.msra.mxu0 0.0
    %574 = vmatprep.subr.mxu0 0.0
    %575 = vmatpush1.msra.mxu0 0.0
    %576 = vmatprep.subr.mxu0 0.0
    %577 = vmatpush1.msra.mxu0 0.0
    %578 = vmatprep.subr.mxu0 0.0
    %579 = vmatpush1.msra.mxu0 0.0
    %580 = vmatprep.subr.mxu0 0.0
    %581 = vmatpush1.msra.mxu0 0.0
    %582 = vmatprep.subr.mxu0 0.0
    %583 = vmatpush1.msra.mxu0 0.0
    %584 = vmatprep.subr.mxu0 0.0
    %585 = vmatpush1.msra.mxu0 0.0
    %586 = vmatprep.subr.mxu0 0.0
    %587 = vmatpush1.msra.mxu0 0.0
    %588 = vmatprep.subr.mxu0 0.0
    %589 = vmatpush1.msra.mxu0 0.0
    %590 = vmatprep.subr.mxu0 0.0
    %591 = vmatpush1.msra.mxu0 0.0
    %592 = vmatprep.subr.mxu0 0.0
    %593 = vmatpush1.msra.mxu0 0.0
    %594 = vmatprep.subr.mxu0 0.0
    %595 = vmatpush1.msra.mxu0 0.0
    %596 = vmatprep.subr.mxu0 0.0
    %597 = vmatpush1.msra.mxu0 0.0
    %598 = vmatprep.subr.mxu0 0.0
    %599 = vmatpush1.msra.mxu0 0.0
    %600 = vmatprep.subr.mxu0 0.0
    %601 = vmatpush1.msra.mxu0 0.0
    %602 = vmatprep.subr.mxu0 0.0
    %603 = vmatpush1.msra.mxu0 0.0
    %604 = vmatprep.subr.mxu0 0.0
    %605 = vmatpush1.msra.mxu0 0.0
    %606 = vmatprep.subr.mxu0 0.0
    %607 = vmatpush1.msra.mxu0 0.0
    %608 = vmatprep.subr.mxu0 0.0
    %609 = vmatpush1.msra.mxu0 0.0
    %610 = vmatprep.subr.mxu0 0.0
    %611 = vmatpush1.msra.mxu0 0.0
    %612 = vmatprep.subr.mxu0 0.0
    %613 = vmatpush1.msra.mxu0 0.0
    %614 = vmatprep.subr.mxu0 0.0
    %615 = vmatpush1.msra.mxu0 0.0
    %616 = vmatprep.subr.mxu0 0.0
    %617 = vmatpush1.msra.mxu0 0.0
    %618 = vmatprep.mubr.f32.mxu0 0.0
    %619 = vmatmul.mubr.f32.gmra.mrb[0].mxu0 %v552
    %v620 = vpop.f32.mrb[0].mxu0
    %v621 = vadd.f32 0.0, %v620
    %v622 = vpop.f32.mrb[0].mxu0
    %623 = vdwg.mxu0
    %v624 = vmul.f32 %v545, %v96
    %v625 = vmul.f32 %v621, %v96
    %v626 = vsel %vm101, %v624, 0.0
    %v627 = vrot.slane %v626, 4
    %v628 = vadd.f32 %v626, %v627
    %v629 = vrot.slane %v628, 2
    %v630 = vadd.f32 %v628, %v629
    %v631 = vrot.slane %v630, 1
    %v632 = vadd.f32 %v630, %v631
    %v633 = vsel %vm101, %v625, 0.0
    %v634 = vrot.slane %v633, 4
    %v635 = vadd.f32 %v633, %v634
    %v636 = vrot.slane %v635, 2
    %v637 = vadd.f32 %v635, %v636
    %v638 = vrot.slane %v637, 1
    %v639 = vadd.f32 %v637, %v638
    %v640 = vld [vmem:[#allocation10] sm:$0xff]
    %v641 = vld [vmem:[#allocation10 + $0x8] sm:$0xff]
    %v642 = vld [vmem:[#allocation10 + $0x10] sm:$0xff]
    %v643 = vld [vmem:[#allocation10 + $0x18] sm:$0xff]
    %v644 = vld [vmem:[%s5] sm:$0x1]
    %v646 = vlaneseq
    %v647 = vshrl.u32 %v646, 7
    %v648 = vsub.s32 0, %v647
    %v649 = vrot.slane %v644, %v648
    %vm653 = vcmask 1041409
    %v654 = vsel %vm653, %v639, %v632
    %v655 = vsel %vm101, %v654, 0
    %657 = vmatprep.subr.mxu0 0.0
    %658 = vmatpush1.msra.mxu0 %v640
    %659 = vmatprep.subr.mxu0 0.0
    %660 = vmatpush1.msra.mxu0 %v641
    %661 = vmatprep.subr.mxu0 0.0
    %662 = vmatpush1.msra.mxu0 %v642
    %663 = vmatprep.subr.mxu0 0.0
    %664 = vmatpush1.msra.mxu0 %v643
    %665 = vmatprep.subr.mxu0 0.0
    %666 = vmatpush1.msra.mxu0 0.0
    %667 = vmatprep.subr.mxu0 0.0
    %668 = vmatpush1.msra.mxu0 0.0
    %669 = vmatprep.subr.mxu0 0.0
    %670 = vmatpush1.msra.mxu0 0.0
    %671 = vmatprep.subr.mxu0 0.0
    %672 = vmatpush1.msra.mxu0 0.0
    %673 = vmatprep.subr.mxu0 0.0
    %674 = vmatpush1.msra.mxu0 0.0
    %675 = vmatprep.subr.mxu0 0.0
    %676 = vmatpush1.msra.mxu0 0.0
    %677 = vmatprep.subr.mxu0 0.0
    %678 = vmatpush1.msra.mxu0 0.0
    %679 = vmatprep.subr.mxu0 0.0
    %680 = vmatpush1.msra.mxu0 0.0
    %681 = vmatprep.subr.mxu0 0.0
    %682 = vmatpush1.msra.mxu0 0.0
    %683 = vmatprep.subr.mxu0 0.0
    %684 = vmatpush1.msra.mxu0 0.0
    %685 = vmatprep.subr.mxu0 0.0
    %686 = vmatpush1.msra.mxu0 0.0
    %687 = vmatprep.subr.mxu0 0.0
    %688 = vmatpush1.msra.mxu0 0.0
    %689 = vmatprep.subr.mxu0 0.0
    %690 = vmatpush1.msra.mxu0 0.0
    %691 = vmatprep.subr.mxu0 0.0
    %692 = vmatpush1.msra.mxu0 0.0
    %693 = vmatprep.subr.mxu0 0.0
    %694 = vmatpush1.msra.mxu0 0.0
    %695 = vmatprep.subr.mxu0 0.0
    %696 = vmatpush1.msra.mxu0 0.0
    %697 = vmatprep.subr.mxu0 0.0
    %698 = vmatpush1.msra.mxu0 0.0
    %699 = vmatprep.subr.mxu0 0.0
    %700 = vmatpush1.msra.mxu0 0.0
    %701 = vmatprep.subr.mxu0 0.0
    %702 = vmatpush1.msra.mxu0 0.0
    %703 = vmatprep.subr.mxu0 0.0
    %704 = vmatpush1.msra.mxu0 0.0
    %705 = vmatprep.subr.mxu0 0.0
    %706 = vmatpush1.msra.mxu0 0.0
    %707 = vmatprep.subr.mxu0 0.0
    %708 = vmatpush1.msra.mxu0 0.0
    %709 = vmatprep.subr.mxu0 0.0
    %710 = vmatpush1.msra.mxu0 0.0
    %711 = vmatprep.subr.mxu0 0.0
    %712 = vmatpush1.msra.mxu0 0.0
    %713 = vmatprep.subr.mxu0 0.0
    %714 = vmatpush1.msra.mxu0 0.0
    %715 = vmatprep.subr.mxu0 0.0
    %716 = vmatpush1.msra.mxu0 0.0
    %717 = vmatprep.subr.mxu0 0.0
    %718 = vmatpush1.msra.mxu0 0.0
    %719 = vmatprep.subr.mxu0 0.0
    %720 = vmatpush1.msra.mxu0 0.0
    %721 = vmatprep.mubr.f32.mxu0 0.0
    %722 = vmatmul.mubr.f32.gmra.mrb[0].mxu0 %v655
    %v723 = vpop.f32.mrb[0].mxu0
    %v724 = vadd.f32 %v649, %v723
    %v725 = vpop.f32.mrb[0].mxu0
    %726 = vdwg.mxu0
    %vm727 = vcmask 254976
    %728 = vst.msk [vmem:[#allocation11] sm:$0x3] %vm727, %v724
    // Predicated region
    $region50: #{tpu_custom_call.1} parent=1 // pred_check
      _
    $region51: #{tpu_custom_call.1} parent=1 // pred_check_branch
      %730 = sbr.rel (0) target = $region53
    $region52: #{tpu_custom_call.1} parent=1 // pred_region
      %s732 = ssub.s32 32, 32
      %733 = vsyncadd [#allocation4], %s732
      %s735 = sshll.u32 [#allocation11], 4
      %s736 = int_to_ptr.vmem [resolvable:$true] %s735
      %738 = dma.vmem_to_hbm [thread:$0]  %s736, 32, %s7, [#allocation4]
    $region53: #{tpu_custom_call.1} parent=1 // pred_fallthru
      _
    // Predicated region
    $region54: #{tpu_custom_call.1} parent=1 // pred_check
      _
    $region55: #{tpu_custom_call.1} parent=1 // pred_check_branch
      %740 = sbr.rel (0) target = $region57
    $region56: #{tpu_custom_call.1} parent=1 // pred_region
      %741 = dma.done [#allocation4], 32
    $region57: #{tpu_custom_call.1} parent=1 // pred_fallthru
      _
    %742 = vsyncpa [#allocation3], 1
    %743 = vsyncpa [#allocation6], 1
    %744 = vsyncpa [#allocation9], 1
    %745 = vsyncpa [#allocation4], 1

</llo_original>
